<compile_context>
chip_gen: v6e
topology: v6e:2x2x1
jax: 0.10.0
libtpu: 0.0.40
codegen_flags: <defaults>
</compile_context>

<pallas_src>
import functools

import jax
import jax.numpy as jnp
import numpy as np
from jax.experimental import pallas as pl
from jax.experimental.pallas import tpu as pltpu


def caml_kernel(xp_ref, cw_ref, cb_ref, uo_ref, ob_ref, y_ref, hb_ref, *, L, K):
    """Fused CAML forward for one (batch-tile, label-tile) block.

    xp_ref : (Bt, Lpa, E)   bf16  zero-padded embedded tokens (Lpa aligned to 16)
    cw_ref : (E, K*H)       bf16  stacked conv weight, cols [k*H:(k+1)*H] = W[:,:,k].T
    cb_ref : (1, H)         f32   conv bias
    uo_ref : (1, H, 2*To)   bf16  [u.weight.T | out.weight.T] tile (lane-dense)
    ob_ref : (1, To)        f32   output bias tile
    y_ref  : (Bt, To)       f32   logits block
    hb_ref : (Bt*Lpa, H)    bf16  VMEM scratch: conv+tanh cached across label tiles
    """
    Bt, Lpa, E = xp_ref.shape
    H = cb_ref.shape[-1]
    To = ob_ref.shape[-1]
    R = Bt * Lpa

    # ---- Conv1d(E->H, kernel K, padding K//2) + bias + tanh: once per batch tile ---
    @pl.when(pl.program_id(1) == 0)
    def _():
        xp2 = xp_ref[...].reshape(R, E)                   # free: Lpa sublane-aligned
        # single stacked matmul: all K taps at once (K*H MXU columns, f32 accumulate)
        z = jnp.dot(xp2, cw_ref[...], preferred_element_type=jnp.float32)  # (R, K*H)
        # combine taps: h[r] = sum_k z[r + k, k*H:(k+1)*H]  (sublane shifts on the XLU)
        acc = z[:, 0:H]
        for k in range(1, K):                             # small static K -> unrolled
            acc = acc + pltpu.roll(z[:, k * H:(k + 1) * H], shift=R - k, axis=0)
        hb_ref[...] = jnp.tanh(acc + cb_ref[...]).astype(jnp.bfloat16)

    # ---- fused scores & gates: one matmul contracting H, To on the lane axis -------
    sg = jnp.dot(hb_ref[...], uo_ref[0], preferred_element_type=jnp.float32)  # (R,2To)
    s = sg[:, :To].reshape(Bt, Lpa, To)                     # f32 scores
    g = sg[:, To:].astype(jnp.bfloat16).reshape(Bt, Lpa, To)  # bf16 gates (halve VMEM)

    # ---- masked softmax over the sequence axis (rows l >= L are padding/garbage) ---
    l_idx = jax.lax.broadcasted_iota(jnp.int32, (1, Lpa, To), 1)
    s = jnp.where(l_idx < L, s, -1e30)
    s_max = jnp.max(s, axis=1, keepdims=True)               # (Bt, 1, To)
    p = jnp.exp(s - s_max)
    denom = jnp.sum(p, axis=1, keepdims=True)               # (Bt, 1, To)

    # ---- y[b,o] = (sum_l p*g) / denom + b_out[o]   (alpha never materialized) ------
    num = jnp.sum(p * g, axis=1)                             # (Bt, To)
    y = num * pl.reciprocal(denom[:, 0, :], approx=True) + ob_ref[...]
    y_ref[...] = y.astype(y_ref.dtype)


def caml_forward(token_ids, params, *, kernel_size, batch_tile=None, o_tile=512):
    """token_ids: (B, L) int32. Returns logits (B, output_dim) in float32."""
    emb_table = params["embedding"]     # (V+2, E), row 0 is padding (zeros)
    conv_w = params["conv_w"]           # (K, E, H), conv_w[k] = W_torch[:, :, k].T
    conv_b = params["conv_b"]           # (1, H)
    u_w = params["u_w"]                 # (O, H)
    out_w = params["out_w"]             # (O, H)
    out_b = params["out_b"]             # (1, O)

    B, L = token_ids.shape
    K = kernel_size
    assert K % 2 == 1, "only odd kernel_size matches PyTorch Conv1d(padding=K//2)"
    pad = K // 2
    E = emb_table.shape[1]
    H = conv_w.shape[2]
    O = u_w.shape[0]

    # Align the padded sequence length to the bf16 sublane tile so all in-kernel
    # (Bt, Lpa, *) <-> (Bt*Lpa, *) reshapes are free.
    SUB = 16
    Lpa = ((L + 2 * pad + SUB - 1) // SUB) * SUB

    # Label tile (lane-dense: multiple of 128; softmax is over L so tiles are indep).
    To = O if O <= o_tile else o_tile
    assert O % To == 0 and To % 128 == 0, "output_dim must tile into 128-multiples"
    nO = O // To

    # Batch tile: target >= ~512 LHS rows per step, capped by a ~20 MiB budget for
    # the f32 s/p + bf16 g intermediates (safe on v7x's 64 MiB VMEM).
    if batch_tile is None:
        vmem_budget = 20 << 20
        bt = max(1, vmem_budget // (10 * Lpa * To))
        bt = min(B, bt, max(1, -(-512 // L)))
    else:
        bt = min(batch_tile, B)
    if bt < B:
        bt = max(8, (bt // 8) * 8)      # sublane-aligned batch blocks when tiling B
    Bt = min(bt, B)
    nb = -(-B // Bt)
    Bp = nb * Bt
    if Bp != B:  # pad with token 0 (zero embedding row); extra rows sliced off below
        token_ids = jnp.pad(token_ids, ((0, Bp - B), (0, 0)))

    # Glue kept in XLA: embedding gather + sequence zero-padding; weights packed
    # lane-dense and cast to bf16 (f32 accumulation happens in-kernel on the MXU).
    x_emb = jnp.take(emb_table.astype(jnp.bfloat16), token_ids, axis=0)   # (Bp, L, E)
    x_pad = jnp.pad(x_emb, ((0, 0), (pad, Lpa - L - pad), (0, 0)))        # (Bp, Lpa, E)

    # conv weight stacked as (E, K*H): column block k holds W_torch[:, :, k].T
    cw_stack = jnp.transpose(conv_w, (1, 0, 2)).reshape(E, K * H).astype(jnp.bfloat16)

    # [u ; out] weights pre-transposed to (H, O) and packed per label tile: (nO, H, 2*To)
    u_t = u_w.T.reshape(H, nO, To)
    o_t = out_w.T.reshape(H, nO, To)
    uo_packed = jnp.transpose(jnp.concatenate([u_t, o_t], axis=-1),
                              (1, 0, 2)).astype(jnp.bfloat16)             # (nO, H, 2To)

    kernel = functools.partial(caml_kernel, L=L, K=K)

    flops = 2 * Bp * Lpa * E * K * H + 2 * Bp * Lpa * H * 2 * O + 4 * Bp * Lpa * O
    transcendentals = Bp * Lpa * (O + H)
    bytes_accessed = (x_pad.size * 2 + cw_stack.size * 2 + conv_b.size * 4
                      + uo_packed.size * 2 * nb + out_b.size * 4 * nb + Bp * O * 4)

    y = pl.pallas_call(
        kernel,
        out_shape=jax.ShapeDtypeStruct((Bp, O), jnp.float32),
        grid_spec=pltpu.PrefetchScalarGridSpec(
            num_scalar_prefetch=0,
            grid=(nb, nO),                                  # (batch tiles, label tiles)
            in_specs=[
                pl.BlockSpec((Bt, Lpa, E), lambda b, o: (b, 0, 0)),     # activations
                pl.BlockSpec((E, K * H), lambda b, o: (0, 0)),          # conv weight
                pl.BlockSpec((1, H), lambda b, o: (0, 0)),              # conv bias
                pl.BlockSpec((1, H, 2 * To), lambda b, o: (o, 0, 0)),   # [u|out] tile
                pl.BlockSpec((1, To), lambda b, o: (0, o)),             # out bias tile
            ],
            out_specs=pl.BlockSpec((Bt, To), lambda b, o: (b, o)),
            scratch_shapes=[pltpu.VMEM((Bt * Lpa, H), jnp.bfloat16)],   # cached conv
        ),
        compiler_params=pltpu.CompilerParams(
            # o must stay sequential per core (conv cache in scratch); b is parallel.
            dimension_semantics=("parallel", "arbitrary"),
            vmem_limit_bytes=64 * 1024 * 1024),
        cost_estimate=pl.CostEstimate(flops=int(flops),
                                      transcendentals=int(transcendentals),
                                      bytes_accessed=int(bytes_accessed)),
    )(x_pad, cw_stack, conv_b, uo_packed, out_b)
    return y[:B]


def caml_reference(token_ids, params, *, kernel_size):
    """Pure-JAX float32 reference of the PyTorch forward (inference mode)."""
    emb_table = params["embedding"]
    conv_w = params["conv_w"]   # (K, E, H)
    conv_b = params["conv_b"]   # (1, H)
    u_w = params["u_w"]
    out_w = params["out_w"]
    out_b = params["out_b"]

    K = kernel_size
    pad = K // 2
    L = token_ids.shape[1]

    x = jnp.take(emb_table, token_ids, axis=0)            # (B, L, E)
    xp = jnp.pad(x, ((0, 0), (pad, pad), (0, 0)))
    conv = sum(jnp.einsum("ble,eh->blh", xp[:, k:k + L, :], conv_w[k])
               for k in range(K)) + conv_b[None, :, :]
    h = jnp.tanh(conv)                                     # (B, L, H)
    scores = jnp.einsum("oh,blh->bol", u_w, h)             # (B, O, L)
    alpha = jax.nn.softmax(scores, axis=2)
    m = jnp.einsum("bol,blh->boh", alpha, h)               # (B, O, H)
    y = jnp.sum(out_w[None] * m, axis=2) + out_b[0]        # (B, O)
    return y


def init_params(key, *, num_words, embedding_dim, hidden_channels, output_dim,
                kernel_size):
    ks = jax.random.split(key, 6)

    def xavier(k, shape, fan_in, fan_out):
        limit = np.sqrt(6.0 / (fan_in + fan_out))
        return jax.random.uniform(k, shape, jnp.float32, -limit, limit)

    V = num_words + 2
    E, H, O, K = embedding_dim, hidden_channels, output_dim, kernel_size

    emb = jax.random.normal(ks[0], (V, E), jnp.float32)
    emb = emb.at[0].set(0.0)  # padding_idx=0

    # PyTorch conv weight is (H, E, K); store as (K, E, H) = W[:, :, k].T per tap.
    conv_w_torch = xavier(ks[1], (H, E, K), fan_in=E * K, fan_out=H * K)
    conv_w = jnp.transpose(conv_w_torch, (2, 1, 0))          # (K, E, H)
    conv_b = jax.random.normal(ks[2], (1, H), jnp.float32) * 0.01

    u_w = xavier(ks[3], (O, H), fan_in=H, fan_out=O)
    out_w = xavier(ks[4], (O, H), fan_in=H, fan_out=O)
    out_b = jax.random.normal(ks[5], (1, O), jnp.float32) * 0.01

    return {
        "embedding": emb,
        "conv_w": conv_w,
        "conv_b": conv_b,
        "u_w": u_w,
        "out_w": out_w,
        "out_b": out_b,
    }


if __name__ == "__main__":
    # Small shapes consistent with the module's forward.  B=16 / batch_tile=8 and
    # O=256 / o_tile=128 give a (2, 2) grid, exercising both the pipelined batch
    # axis and the conv-cache reuse across label tiles.
    B = 16             # batch
    L = 16             # sentence_len (seq)
    NUM_WORDS = 50     # vocab size (num_words)
    E = 32             # embedding_dim
    H = 32             # hidden_channels
    O = 256            # output_dim (labels)
    K = 3              # kernel_size

    key = jax.random.PRNGKey(0)
    k_param, k_tok = jax.random.split(key)

    params = init_params(k_param, num_words=NUM_WORDS, embedding_dim=E,
                         hidden_channels=H, output_dim=O, kernel_size=K)
    token_ids = jax.random.randint(k_tok, (B, L), 0, NUM_WORDS + 2, jnp.int32)

    y = caml_forward(token_ids, params, kernel_size=K, batch_tile=8, o_tile=128)
    y = jax.block_until_ready(y)

    y_ref = jax.block_until_ready(caml_reference(token_ids, params, kernel_size=K))
    # Kernel uses bf16 matmul operands / bf16 gates with f32 accumulation; compare
    # against the pure-f32 reference with a tolerance sized for bf16 rounding.
    np.testing.assert_allclose(np.asarray(y), np.asarray(y_ref),
                               rtol=3e-2, atol=3e-2)

    print("KERNEL_OK")
</pallas_src>

<mosaic_0001>
module attributes {stable_mosaic.version = 11 : i64} {
  func.func @caml_kernel(%arg0: i32, %arg1: i32, %arg2: memref<8x32x32xbf16, #tpu.memory_space<vmem>>, %arg3: memref<32x96xbf16, #tpu.memory_space<vmem>>, %arg4: memref<1x32xf32, #tpu.memory_space<vmem>>, %arg5: memref<1x32x256xbf16, #tpu.memory_space<vmem>>, %arg6: memref<1x128xf32, #tpu.memory_space<vmem>>, %arg7: memref<8x128xf32, #tpu.memory_space<vmem>>, %arg8: memref<256x32xbf16, #tpu.memory_space<vmem>>) attributes {dimension_semantics = [#tpu.dimension_semantics<parallel>, #tpu.dimension_semantics<arbitrary>], iteration_bounds = array<i64: 2, 2>, scalar_prefetch = 0 : i64, scratch_operands = 1 : i64, tpu.core_type = #tpu.core_type<tc>, window_params = [{transform_indices = @transform_0, window_bounds = array<i64: 8, 32, 32>}, {pipeline_mode = #tpu.pipeline_mode<synchronous>, transform_indices = @transform_1, window_bounds = array<i64: 32, 96>}, {pipeline_mode = #tpu.pipeline_mode<synchronous>, transform_indices = @transform_2, window_bounds = array<i64: 1, 32>}, {transform_indices = @transform_3, window_bounds = array<i64: 1, 32, 256>}, {transform_indices = @transform_4, window_bounds = array<i64: 1, 128>}, {transform_indices = @transform_5, window_bounds = array<i64: 8, 128>}]} {
    %c0_i32 = arith.constant 0 : i32
    %0 = arith.cmpi eq, %arg1, %c0_i32 : i32
    %1 = arith.extui %0 : i1 to i32
    %c0_i32_0 = arith.constant 0 : i32
    %2 = arith.cmpi ne, %1, %c0_i32_0 : i32
    scf.if %2 {
      %c0_13 = arith.constant 0 : index
      %c0_14 = arith.constant 0 : index
      %c0_15 = arith.constant 0 : index
      %36 = vector.load %arg2[%c0_13, %c0_14, %c0_15] : memref<8x32x32xbf16, #tpu.memory_space<vmem>>, vector<8x32x32xbf16>
      %37 = vector.shape_cast %36 : vector<8x32x32xbf16> to vector<256x32xbf16>
      %c0_16 = arith.constant 0 : index
      %c0_17 = arith.constant 0 : index
      %38 = vector.load %arg3[%c0_16, %c0_17] : memref<32x96xbf16, #tpu.memory_space<vmem>>, vector<32x96xbf16>
      %cst_18 = arith.constant dense<0.000000e+00> : vector<256x96xf32>
      %39 = tpu.matmul %37, %38, %cst_18 {dimension_numbers = #tpu.dot_dimension_numbers<[1], [0], [0], [1], [0, 0, 1, 1], [], []>} : vector<256x32xbf16>, vector<32x96xbf16>, vector<256x96xf32> -> vector<256x96xf32>
      %40 = vector.extract_strided_slice %39 {offsets = [0, 0], sizes = [256, 32], strides = [1, 1]} : vector<256x96xf32> to vector<256x32xf32>
      %41 = vector.extract_strided_slice %39 {offsets = [0, 32], sizes = [256, 32], strides = [1, 1]} : vector<256x96xf32> to vector<256x32xf32>
      %c255_i32 = arith.constant 255 : i32
      %42 = tpu.dynamic_rotate %41 by %c255_i32 dim 0 : vector<256x32xf32>, i32 -> vector<256x32xf32>
      %43 = arith.addf %40, %42 : vector<256x32xf32>
      %44 = vector.extract_strided_slice %39 {offsets = [0, 64], sizes = [256, 32], strides = [1, 1]} : vector<256x96xf32> to vector<256x32xf32>
      %c254_i32 = arith.constant 254 : i32
      %45 = tpu.dynamic_rotate %44 by %c254_i32 dim 0 : vector<256x32xf32>, i32 -> vector<256x32xf32>
      %46 = arith.addf %43, %45 : vector<256x32xf32>
      %c0_19 = arith.constant 0 : index
      %c0_20 = arith.constant 0 : index
      %47 = vector.load %arg4[%c0_19, %c0_20] : memref<1x32xf32, #tpu.memory_space<vmem>>, vector<1x32xf32>
      %48 = vector.broadcast %47 : vector<1x32xf32> to vector<256x32xf32>
      %49 = arith.addf %46, %48 : vector<256x32xf32>
      %50 = math.tanh %49 : vector<256x32xf32>
      %51 = arith.truncf %50 : vector<256x32xf32> to vector<256x32xbf16>
      %c0_21 = arith.constant 0 : index
      %c0_22 = arith.constant 0 : index
      %52 = vector.load %arg8[%c0_21, %c0_22] : memref<256x32xbf16, #tpu.memory_space<vmem>>, vector<256x32xbf16>
      tpu.vector_store %arg8[%c0_21, %c0_22], %51 {strides = array<i32>} : memref<256x32xbf16, #tpu.memory_space<vmem>>, vector<256x32xbf16>,
    } else {
    }
    %c0 = arith.constant 0 : index
    %c0_1 = arith.constant 0 : index
    %3 = vector.load %arg8[%c0, %c0_1] : memref<256x32xbf16, #tpu.memory_space<vmem>>, vector<256x32xbf16>
    %c0_2 = arith.constant 0 : index
    %c0_3 = arith.constant 0 : index
    %c0_4 = arith.constant 0 : index
    %4 = vector.load %arg5[%c0_2, %c0_3, %c0_4] : memref<1x32x256xbf16, #tpu.memory_space<vmem>>, vector<1x32x256xbf16>
    %5 = vector.shape_cast %4 : vector<1x32x256xbf16> to vector<32x256xbf16>
    %cst = arith.constant dense<0.000000e+00> : vector<256x256xf32>
    %6 = tpu.matmul %3, %5, %cst {dimension_numbers = #tpu.dot_dimension_numbers<[1], [0], [0], [1], [0, 0, 1, 1], [], []>} : vector<256x32xbf16>, vector<32x256xbf16>, vector<256x256xf32> -> vector<256x256xf32>
    %7 = vector.extract_strided_slice %6 {offsets = [0, 0], sizes = [256, 128], strides = [1, 1]} : vector<256x256xf32> to vector<256x128xf32>
    %8 = vector.shape_cast %7 : vector<256x128xf32> to vector<8x32x128xf32>
    %9 = vector.extract_strided_slice %6 {offsets = [0, 128], sizes = [256, 128], strides = [1, 1]} : vector<256x256xf32> to vector<256x128xf32>
    %10 = arith.truncf %9 : vector<256x128xf32> to vector<256x128xbf16>
    %11 = vector.shape_cast %10 : vector<256x128xbf16> to vector<8x32x128xbf16>
    %12 = tpu.iota {dimensions = array<i32: 1>} : vector<1x32x128xi32>
    %c16_i32 = arith.constant 16 : i32
    %13 = vector.broadcast %c16_i32 : i32 to vector<1x32x128xi32>
    %14 = arith.cmpi slt, %12, %13 : vector<1x32x128xi32>
    %cst_5 = arith.constant -1.000000e+30 : f32
    %15 = vector.shape_cast %14 : vector<1x32x128xi1> to vector<1x32x128xi1>
    %16 = vector.broadcast %15 : vector<1x32x128xi1> to vector<8x32x128xi1>
    %17 = vector.broadcast %cst_5 : f32 to vector<8x32x128xf32>
    %18 = arith.select %16, %8, %17 : vector<8x32x128xi1>, vector<8x32x128xf32>
    %cst_6 = arith.constant dense<0xFF800000> : vector<8x128xf32>
    %19 = vector.multi_reduction <maximumf>, %18, %cst_6 [1] : vector<8x32x128xf32> to vector<8x128xf32>
    %20 = vector.shape_cast %19 : vector<8x128xf32> to vector<8x1x128xf32>
    %21 = vector.broadcast %20 : vector<8x1x128xf32> to vector<8x32x128xf32>
    %22 = arith.subf %18, %21 : vector<8x32x128xf32>
    %23 = math.exp %22 : vector<8x32x128xf32>
    %cst_7 = arith.constant dense<0.000000e+00> : vector<8x128xf32>
    %24 = vector.multi_reduction <add>, %23, %cst_7 [1] : vector<8x32x128xf32> to vector<8x128xf32>
    %25 = vector.shape_cast %24 : vector<8x128xf32> to vector<8x1x128xf32>
    %26 = arith.extf %11 : vector<8x32x128xbf16> to vector<8x32x128xf32>
    %27 = arith.mulf %23, %26 : vector<8x32x128xf32>
    %cst_8 = arith.constant dense<0.000000e+00> : vector<8x128xf32>
    %28 = vector.multi_reduction <add>, %27, %cst_8 [1] : vector<8x32x128xf32> to vector<8x128xf32>
    %29 = vector.shape_cast %25 : vector<8x1x128xf32> to vector<8x128xf32>
    %30 = tpu.reciprocal %29 {approx = true} : vector<8x128xf32> -> vector<8x128xf32>
    %31 = arith.mulf %28, %30 : vector<8x128xf32>
    %c0_9 = arith.constant 0 : index
    %c0_10 = arith.constant 0 : index
    %32 = vector.load %arg6[%c0_9, %c0_10] : memref<1x128xf32, #tpu.memory_space<vmem>>, vector<1x128xf32>
    %33 = vector.broadcast %32 : vector<1x128xf32> to vector<8x128xf32>
    %34 = arith.addf %31, %33 : vector<8x128xf32>
    %c0_11 = arith.constant 0 : index
    %c0_12 = arith.constant 0 : index
    %35 = vector.load %arg7[%c0_11, %c0_12] : memref<8x128xf32, #tpu.memory_space<vmem>>, vector<8x128xf32>
    tpu.vector_store %arg7[%c0_11, %c0_12], %34 {strides = array<i32>} : memref<8x128xf32, #tpu.memory_space<vmem>>, vector<8x128xf32>,
    return
  }
  func.func @transform_0(%arg0: i32, %arg1: i32) -> (i32, i32, i32) {
    %c0_i32 = arith.constant 0 : i32
    %c0_i32_0 = arith.constant 0 : i32
    %c0_i32_1 = arith.constant 0 : i32
    return %arg0, %c0_i32, %c0_i32_0 : i32, i32, i32
  }
  func.func @transform_1(%arg0: i32, %arg1: i32) -> (i32, i32) {
    %c0_i32 = arith.constant 0 : i32
    %c0_i32_0 = arith.constant 0 : i32
    %c0_i32_1 = arith.constant 0 : i32
    return %c0_i32, %c0_i32_0 : i32, i32
  }
  func.func @transform_2(%arg0: i32, %arg1: i32) -> (i32, i32) {
    %c0_i32 = arith.constant 0 : i32
    %c0_i32_0 = arith.constant 0 : i32
    %c0_i32_1 = arith.constant 0 : i32
    return %c0_i32, %c0_i32_0 : i32, i32
  }
  func.func @transform_3(%arg0: i32, %arg1: i32) -> (i32, i32, i32) {
    %c0_i32 = arith.constant 0 : i32
    %c0_i32_0 = arith.constant 0 : i32
    %c0_i32_1 = arith.constant 0 : i32
    return %arg1, %c0_i32, %c0_i32_0 : i32, i32, i32
  }
  func.func @transform_4(%arg0: i32, %arg1: i32) -> (i32, i32) {
    %c0_i32 = arith.constant 0 : i32
    %c0_i32_0 = arith.constant 0 : i32
    return %c0_i32, %arg1 : i32, i32
  }
  func.func @transform_5(%arg0: i32, %arg1: i32) -> (i32, i32) {
    %c0_i32 = arith.constant 0 : i32
    return %arg0, %arg1 : i32, i32
  }
}

</mosaic_0001>

<llo_original>
// kernel: tpu_custom_call.1
$region0: #{tpu_custom_call.1}
  #allocation0 [shape = 'u32[]', space=smem, size = 0x4, offset = 0x4, fixed_abs, tag = 'smem constant byte address 0x4 - core index']
  #allocation1 [shape = 'u32[144,128]{1,0:T(1,128)}', space=vmem, size = 0x12000, scoped, tag = 'internal scratch']
  #allocation2 [shape = 'bf16[256,32]{1,0:T(8,128)(2,1)}', space=vmem, size = 0x10000, scoped, tag = 'scratch operand']
  %s0 = inlined_call_operand.hbm [shape: bf16[16,32,32], index: 0, kind: input, shape index: {}]
  %s1 = inlined_call_operand.hbm [shape: bf16[32,96], index: 1, kind: input, shape index: {}]
  %s2 = inlined_call_operand.vmem [shape: f32[1,32], index: 2, kind: input, shape index: {}]
  %s3 = inlined_call_operand.hbm [shape: bf16[2,32,256], index: 3, kind: input, shape index: {}]
  %s4 = inlined_call_operand.vmem [shape: f32[1,256], index: 4, kind: input, shape index: {}]
  %s5 = inlined_call_operand.hbm [shape: f32[16,256], index: 5, kind: output, shape index: {}]
  %s6 = sld [smem:[#allocation0]]
  $region69: #{tpu_custom_call.1} parent=0
    _
  %s8 = ssub.s32 1, %s6
  %s9 = scalar_select 0, %s8, %s6
  $region1: #{tpu_custom_call.1} parent=0
    #allocation3 [shape = 'u8[131072]{0}', space=vmem, size = 0x20000, scoped, tag = 'input window, operand 0']
    #allocation4 [shape = 's32[2]{0}', space=sflag, size = 0x8, scoped, tag = 'scoped memory for tpu_custom_call.1']
    #allocation5 [shape = 's32[2]{0}', space=sflag, size = 0x8, scoped, tag = 'scoped memory for tpu_custom_call.1']
    #allocation6 [shape = 'u8[8192]{0}', space=vmem, size = 0x2000, scoped, tag = 'input window, operand 1, single buffered']
    #allocation7 [shape = 's32[1]{0}', space=sflag, size = 0x4, scoped, tag = 'scoped memory for tpu_custom_call.1']
    #allocation8 [shape = 'u8[32768]{0}', space=vmem, size = 0x8000, scoped, tag = 'input window, operand 3']
    #allocation9 [shape = 'u8[8192]{0}', space=vmem, size = 0x2000, scoped, tag = 'output window, operand 0']
    %10 = vsyncpa [#allocation4], 0
    %s11 = scalar_lea.sflag [#allocation4], 1
    %12 = vsyncpa %s11, 0
    %13 = vsyncpa [#allocation7], 0
    %14 = vsyncpa [#allocation5], 0
    %s15 = scalar_lea.sflag [#allocation5], 1
    %16 = vsyncpa %s15, 0
    loop: start=0, step=1, limit=6
    $region2: #{tpu_custom_call.1} parent=1 // loop_pre_header
      _
    $region3: #{tpu_custom_call.1} parent=1 // loop_header
      %s18 = sphi 0, %s22
      %p19 = scmp.ge.s32.totalorder %s18, 6
      %s25 = sphi 0, %s37
      %s26 = sphi 0, %s33
      %s27 = sphi 0, %s25
      %s28 = sphi 0, %s26
      %s29 = sphi 0, %s27
      %s30 = sphi 0, %s28
      %s40 = sphi 0, %s42
      %s43 = sphi 0, %s40
      %s44 = sphi 0, %s43
      %s60 = sphi 0, %s44
      %s64 = sphi 0, %s64
      %s66 = sphi 0, %s64
      %s67 = sphi 0, %s66
      %s81 = sphi 0, %s67
      %s85 = sphi 0, %s85
      %s87 = sphi 0, %s85
      %s88 = sphi 0, %s87
      %s102 = sphi 0, %s88
      %s108 = sphi 0, %s110
      %s111 = sphi 0, %s108
      %s112 = sphi 0, %s111
      %s128 = sphi 0, %s112
      %s134 = sphi 0, %s136
      %s137 = sphi 0, %s134
      %s138 = sphi 0, %s137
      %s154 = sphi 0, %s138
      %s162 = sphi 0, %s164
      %s165 = sphi 0, %s162
      %s166 = sphi 0, %s165
      %s182 = sphi 0, %s166
    $region4: #{tpu_custom_call.1} parent=1 // loop_header_branch
      %21 = sbr.rel (%p19) target = $region8
    $region5: #{tpu_custom_call.1} parent=1 // loop_body
      %s23 = ssub.s32 %s18, 1
      %s24 = ssub.s32 %s18, 2
      %s31 = sadd.s32 1, %s26
      %p32 = scmp.ge.s32.totalorder %s31, 2
      %s33 = scalar_select %p32, 0, %s31
      %s34 = sadd.s32 1, %s25
      %s35 = scalar_select %p32, %s34, %s25
      %p36 = scmp.ge.s32.totalorder %s35, 2
      %s37 = scalar_select %p36, 0, %s35
      %s38 = ssub.s32 %s25, %s37
      %p39 = scmp.eq.s32.totalorder %s38, 0
      %s41 = sadd.s32 %s40, 1
      %s42 = scalar_select %p39, %s40, %s41
      %p45 = pneg %p39
      %p46 = scmp.eq.s32.totalorder %s18, 3
      %p47 = por %p45, %p46
      %p48 = scmp.ne.s32.totalorder %s40, %s43
      %p49 = scmp.eq.s32.totalorder %s18, 0
      %p50 = por %p48, %p49
      %p51 = scmp.ne.s32.totalorder %s40, %s43
      %p52 = scmp.eq.s32.totalorder %s23, 3
      %p53 = por %p51, %p52
      %p54 = scmp.ne.s32.totalorder %s43, %s44
      %p55 = scmp.eq.s32.totalorder %s23, 0
      %p56 = por %p54, %p55
      %p57 = scmp.ne.s32.totalorder %s43, %s44
      %p58 = scmp.eq.s32.totalorder %s24, 3
      %p59 = por %p57, %p58
      %p61 = scmp.ne.s32.totalorder %s44, %s60
      %p62 = scmp.eq.s32.totalorder %s24, 0
      %p63 = por %p61, %p62
      %s65 = sadd.s32 %s64, 1
      %p68 = scmp.eq.s32.totalorder %s18, 3
      %p69 = scmp.ne.s32.totalorder %s64, %s66
      %p70 = scmp.eq.s32.totalorder %s18, 0
      %p71 = por %p69, %p70
      %p72 = scmp.ne.s32.totalorder %s64, %s66
      %p73 = scmp.eq.s32.totalorder %s23, 3
      %p74 = por %p72, %p73
      %p75 = scmp.ne.s32.totalorder %s66, %s67
      %p76 = scmp.eq.s32.totalorder %s23, 0
      %p77 = por %p75, %p76
      %p78 = scmp.ne.s32.totalorder %s66, %s67
      %p79 = scmp.eq.s32.totalorder %s24, 3
      %p80 = por %p78, %p79
      %p82 = scmp.ne.s32.totalorder %s67, %s81
      %p83 = scmp.eq.s32.totalorder %s24, 0
      %p84 = por %p82, %p83
      %s86 = sadd.s32 %s85, 1
      %p89 = scmp.eq.s32.totalorder %s18, 3
      %p90 = scmp.ne.s32.totalorder %s85, %s87
      %p91 = scmp.eq.s32.totalorder %s18, 0
      %p92 = por %p90, %p91
      %p93 = scmp.ne.s32.totalorder %s85, %s87
      %p94 = scmp.eq.s32.totalorder %s23, 3
      %p95 = por %p93, %p94
      %p96 = scmp.ne.s32.totalorder %s87, %s88
      %p97 = scmp.eq.s32.totalorder %s23, 0
      %p98 = por %p96, %p97
      %p99 = scmp.ne.s32.totalorder %s87, %s88
      %p100 = scmp.eq.s32.totalorder %s24, 3
      %p101 = por %p99, %p100
      %p103 = scmp.ne.s32.totalorder %s88, %s102
      %p104 = scmp.eq.s32.totalorder %s24, 0
      %p105 = por %p103, %p104
      %s106 = ssub.s32 %s26, %s33
      %p107 = scmp.eq.s32.totalorder %s106, 0
      %s109 = sadd.s32 %s108, 1
      %s110 = scalar_select %p107, %s108, %s109
      %p113 = pneg %p107
      %p114 = scmp.eq.s32.totalorder %s18, 3
      %p115 = por %p113, %p114
      %p116 = scmp.ne.s32.totalorder %s108, %s111
      %p117 = scmp.eq.s32.totalorder %s18, 0
      %p118 = por %p116, %p117
      %p119 = scmp.ne.s32.totalorder %s108, %s111
      %p120 = scmp.eq.s32.totalorder %s23, 3
      %p121 = por %p119, %p120
      %p122 = scmp.ne.s32.totalorder %s111, %s112
      %p123 = scmp.eq.s32.totalorder %s23, 0
      %p124 = por %p122, %p123
      %p125 = scmp.ne.s32.totalorder %s111, %s112
      %p126 = scmp.eq.s32.totalorder %s24, 3
      %p127 = por %p125, %p126
      %p129 = scmp.ne.s32.totalorder %s112, %s128
      %p130 = scmp.eq.s32.totalorder %s24, 0
      %p131 = por %p129, %p130
      %s132 = ssub.s32 %s26, %s33
      %p133 = scmp.eq.s32.totalorder %s132, 0
      %s135 = sadd.s32 %s134, 1
      %s136 = scalar_select %p133, %s134, %s135
      %p139 = pneg %p133
      %p140 = scmp.eq.s32.totalorder %s18, 3
      %p141 = por %p139, %p140
      %p142 = scmp.ne.s32.totalorder %s134, %s137
      %p143 = scmp.eq.s32.totalorder %s18, 0
      %p144 = por %p142, %p143
      %p145 = scmp.ne.s32.totalorder %s134, %s137
      %p146 = scmp.eq.s32.totalorder %s23, 3
      %p147 = por %p145, %p146
      %p148 = scmp.ne.s32.totalorder %s137, %s138
      %p149 = scmp.eq.s32.totalorder %s23, 0
      %p150 = por %p148, %p149
      %p151 = scmp.ne.s32.totalorder %s137, %s138
      %p152 = scmp.eq.s32.totalorder %s24, 3
      %p153 = por %p151, %p152
      %p155 = scmp.ne.s32.totalorder %s138, %s154
      %p156 = scmp.eq.s32.totalorder %s24, 0
      %p157 = por %p155, %p156
      %s158 = ssub.s32 %s25, %s37
      %s159 = ssub.s32 %s26, %s33
      %s160 = sor.u32 %s158, %s159
      %p161 = scmp.eq.s32.totalorder %s160, 0
      %s163 = sadd.s32 %s162, 1
      %s164 = scalar_select %p161, %s162, %s163
      %p167 = pneg %p161
      %p168 = scmp.eq.s32.totalorder %s18, 3
      %p169 = por %p167, %p168
      %p170 = scmp.ne.s32.totalorder %s162, %s165
      %p171 = scmp.eq.s32.totalorder %s18, 0
      %p172 = por %p170, %p171
      %p173 = scmp.ne.s32.totalorder %s162, %s165
      %p174 = scmp.eq.s32.totalorder %s23, 3
      %p175 = por %p173, %p174
      %p176 = scmp.ne.s32.totalorder %s165, %s166
      %p177 = scmp.eq.s32.totalorder %s23, 0
      %p178 = por %p176, %p177
      %p179 = scmp.ne.s32.totalorder %s165, %s166
      %p180 = scmp.eq.s32.totalorder %s24, 3
      %p181 = por %p179, %p180
      %p183 = scmp.ne.s32.totalorder %s166, %s182
      %p184 = scmp.eq.s32.totalorder %s24, 0
      %p185 = por %p183, %p184
      %p186 = scmp.le.s32.totalorder 1, %s18
      %p187 = scmp.lt.s32.totalorder %s18, 5
      %p188 = pnand %p186, %p187
      %p189 = pneg %p188
      // Predicated region
      $region9: #{tpu_custom_call.1} parent=5 // pred_check
        _
      $region10: #{tpu_custom_call.1} parent=5 // pred_check_branch
        %191 = sbr.rel (%p188) target = $region12
      $region11: #{tpu_custom_call.1} parent=5 // pred_region
        %s192 = ssub.s32 %s18, 1
        // Predicated region
        $region13: #{tpu_custom_call.1} parent=11 // pred_check
          %p193 = pneg %p77
        $region14: #{tpu_custom_call.1} parent=11 // pred_check_branch
          %195 = sbr.rel (%p193) target = $region16
        $region15: #{tpu_custom_call.1} parent=11 // pred_region
          %s197 = ssub.s32 256, 256
          %198 = vsyncadd [#allocation7], %s197
          %s199 = sshll.u32 [#allocation6], 4
          %s200 = int_to_ptr.vmem [resolvable:$true] %s199
          %205 = dma.hbm_to_vmem [thread:$0]  %s1, 256, %s200, [#allocation7], 64, 64, 4
        $region16: #{tpu_custom_call.1} parent=11 // pred_fallthru
          _
        // Predicated region
        $region17: #{tpu_custom_call.1} parent=11 // pred_check
          %p206 = pneg %p98
        $region18: #{tpu_custom_call.1} parent=11 // pred_check_branch
          %208 = sbr.rel (%p206) target = $region20
        $region19: #{tpu_custom_call.1} parent=11 // pred_region
          _
        $region20: #{tpu_custom_call.1} parent=11 // pred_fallthru
          _
      $region12: #{tpu_custom_call.1} parent=5 // pred_fallthru
        _
      %p209 = scmp.lt.s32.totalorder %s18, 4
      // Predicated region
      $region21: #{tpu_custom_call.1} parent=5 // pred_check
        %p210 = pneg %p209
      $region22: #{tpu_custom_call.1} parent=5 // pred_check_branch
        %212 = sbr.rel (%p210) target = $region24
      $region23: #{tpu_custom_call.1} parent=5 // pred_region
        // Predicated region
        $region25: #{tpu_custom_call.1} parent=23 // pred_check
          %p213 = pneg %p50
        $region26: #{tpu_custom_call.1} parent=23 // pred_check_branch
          %215 = sbr.rel (%p213) target = $region28
        $region27: #{tpu_custom_call.1} parent=23 // pred_region
          %s216 = sand.u32 %s18, 1
          %s217 = scalar_lea.sflag [#allocation4], %s216
          %s218 = sand.u32 %s40, 1
          %s219 = smul.addr %s218, 128
          %s220 = scalar_lea.vmem [#allocation3], %s219
          %s221 = smul.u32 8, %s25
          %s223 = ssub.s32 2048, 2048
          %224 = vsyncadd %s217, %s223
          %s225 = smul.addr %s221, 4
          %s226 = smul.addr %s225, 64
          %s227 = scalar_lea.hbm %s0, %s226
          %s228 = sshll.u32 %s220, 4
          %s229 = int_to_ptr.vmem [resolvable:$true] %s228
          %234 = dma.hbm_to_vmem [thread:$0]  %s227, 2048, %s229, %s217, 64, 64, 4
        $region28: #{tpu_custom_call.1} parent=23 // pred_fallthru
          _
        // Predicated region
        $region29: #{tpu_custom_call.1} parent=23 // pred_check
          %p235 = pneg %p118
        $region30: #{tpu_custom_call.1} parent=23 // pred_check_branch
          %237 = sbr.rel (%p235) target = $region32
        $region31: #{tpu_custom_call.1} parent=23 // pred_region
          %s238 = sand.u32 %s18, 1
          %s239 = scalar_lea.sflag [#allocation4], %s238
          %s240 = sand.u32 %s108, 1
          %s241 = smul.addr %s240, 32
          %s242 = scalar_lea.vmem [#allocation8], %s241
          %s244 = ssub.s32 512, 512
          %245 = vsyncadd %s239, %s244
          %s246 = smul.addr %s26, 8
          %s247 = smul.addr %s246, 64
          %s248 = scalar_lea.hbm %s3, %s247
          %s249 = sshll.u32 %s242, 4
          %s250 = int_to_ptr.vmem [resolvable:$true] %s249
          %255 = dma.hbm_to_vmem [thread:$0]  %s248, 512, %s250, %s239, 128, 128, 8
        $region32: #{tpu_custom_call.1} parent=23 // pred_fallthru
          _
        // Predicated region
        $region33: #{tpu_custom_call.1} parent=23 // pred_check
          %p256 = pneg %p144
        $region34: #{tpu_custom_call.1} parent=23 // pred_check_branch
          %258 = sbr.rel (%p256) target = $region36
        $region35: #{tpu_custom_call.1} parent=23 // pred_region
          %p259 = scmp.lt.s32.totalorder %s26, 1
          %s260 = scalar_select %p259, %s26, 1
          %s261 = scalar_lea.vmem %s4, %s260
        $region36: #{tpu_custom_call.1} parent=23 // pred_fallthru
          _
      $region24: #{tpu_custom_call.1} parent=5 // pred_fallthru
        _
      %p262 = scmp.le.s32.totalorder 1, %s18
      %p263 = scmp.lt.s32.totalorder %s18, 5
      %p264 = pnand %p262, %p263
      %p265 = pneg %p264
      // Predicated region
      $region37: #{tpu_custom_call.1} parent=5 // pred_check
        _
      $region38: #{tpu_custom_call.1} parent=5 // pred_check_branch
        %267 = sbr.rel (%p264) target = $region40
      $region39: #{tpu_custom_call.1} parent=5 // pred_region
        %s268 = ssub.s32 %s18, 1
        %s269 = sand.u32 %s23, 1
        %s270 = scalar_lea.sflag [#allocation4], %s269
        %s271 = sand.u32 %s43, 1
        %s272 = smul.addr %s271, 128
        %s273 = scalar_lea.vmem [#allocation3], %s272
        // Predicated region
        $region41: #{tpu_custom_call.1} parent=39 // pred_check
          %p274 = pneg %p56
        $region42: #{tpu_custom_call.1} parent=39 // pred_check_branch
          %276 = sbr.rel (%p274) target = $region44
        $region43: #{tpu_custom_call.1} parent=39 // pred_region
          %277 = dma.done %s270, 2048
        $region44: #{tpu_custom_call.1} parent=39 // pred_fallthru
          _
        // Predicated region
        $region45: #{tpu_custom_call.1} parent=39 // pred_check
          %p278 = pneg %p77
        $region46: #{tpu_custom_call.1} parent=39 // pred_check_branch
          %280 = sbr.rel (%p278) target = $region48
        $region47: #{tpu_custom_call.1} parent=39 // pred_region
          %281 = dma.done [#allocation7], 256
        $region48: #{tpu_custom_call.1} parent=39 // pred_fallthru
          _
        %s282 = sand.u32 %s23, 1
        %s283 = scalar_lea.sflag [#allocation4], %s282
        %s284 = sand.u32 %s111, 1
        %s285 = smul.addr %s284, 32
        %s286 = scalar_lea.vmem [#allocation8], %s285
        // Predicated region
        $region49: #{tpu_custom_call.1} parent=39 // pred_check
          %p287 = pneg %p124
        $region50: #{tpu_custom_call.1} parent=39 // pred_check_branch
          %289 = sbr.rel (%p287) target = $region52
        $region51: #{tpu_custom_call.1} parent=39 // pred_region
          %290 = dma.done %s283, 512
        $region52: #{tpu_custom_call.1} parent=39 // pred_fallthru
          _
        %s291 = sand.u32 %s23, 1
        %s292 = scalar_lea.sflag [#allocation4], %s291
        %s293 = sand.u32 %s43, 1
        %s294 = smul.addr %s293, 128
        %s295 = scalar_lea.vmem [#allocation3], %s294
        %p296 = pneg %p56
        %p297 = pneg %p53
        %p298 = pneg %p77
        %p299 = pneg %p74
        %p300 = pneg %p98
        %p301 = pneg %p95
        %s302 = sand.u32 %s23, 1
        %s303 = scalar_lea.sflag [#allocation4], %s302
        %s304 = sand.u32 %s111, 1
        %s305 = smul.addr %s304, 32
        %s306 = scalar_lea.vmem [#allocation8], %s305
        %p307 = pneg %p124
        %p308 = pneg %p121
        %p309 = scmp.lt.s32.totalorder %s28, 1
        %s310 = scalar_select %p309, %s28, 1
        %s311 = scalar_lea.vmem %s4, %s310
        %p312 = pneg %p150
        %p313 = pneg %p147
        %p314 = pneg %p178
        %p315 = pneg %p175
        %s316 = sand.u32 %s165, 1
        %s317 = scalar_lea.sflag [#allocation5], %s316
        %s318 = sand.u32 %s165, 1
        %s319 = smul.addr %s318, 8
        %s320 = scalar_lea.vmem [#allocation9], %s319
        %s321 = smul.u32 8, %s27
        %p322 = scmp.lt.s32.totalorder %s28, 1
        %s323 = scalar_select %p322, %s28, 1
        %s324 = scalar_lea.vmem %s4, %s323
        %p326 = scmp.eq.s32.totalorder %s28, 0
        // Predicated region
        $region53: #{tpu_custom_call.1} parent=39 // pred_check
          %p327 = pneg %p326
        $region54: #{tpu_custom_call.1} parent=39 // pred_check_branch
          %329 = sbr.rel (%p327) target = $region56
        $region55: #{tpu_custom_call.1} parent=39 // pred_region
          %v330 = vld [vmem:[%s273] sm:$0xf]
          %v331 = vld [vmem:[%s273 + $0x4] sm:$0xf]
          %v332 = vld [vmem:[%s273 + $0x8] sm:$0xf]
          %v333 = vld [vmem:[%s273 + $0xc] sm:$0xf]
          %v334 = vld [vmem:[%s273 + $0x10] sm:$0xf]
          %v335 = vld [vmem:[%s273 + $0x14] sm:$0xf]
          %v336 = vld [vmem:[%s273 + $0x18] sm:$0xf]
          %v337 = vld [vmem:[%s273 + $0x1c] sm:$0xf]
          %v338 = vld [vmem:[%s273 + $0x20] sm:$0xf]
          %v339 = vld [vmem:[%s273 + $0x24] sm:$0xf]
          %v340 = vld [vmem:[%s273 + $0x28] sm:$0xf]
          %v341 = vld [vmem:[%s273 + $0x2c] sm:$0xf]
          %v342 = vld [vmem:[%s273 + $0x30] sm:$0xf]
          %v343 = vld [vmem:[%s273 + $0x34] sm:$0xf]
          %v344 = vld [vmem:[%s273 + $0x38] sm:$0xf]
          %v345 = vld [vmem:[%s273 + $0x3c] sm:$0xf]
          %v346 = vld [vmem:[%s273 + $0x40] sm:$0xf]
          %v347 = vld [vmem:[%s273 + $0x44] sm:$0xf]
          %v348 = vld [vmem:[%s273 + $0x48] sm:$0xf]
          %v349 = vld [vmem:[%s273 + $0x4c] sm:$0xf]
          %v350 = vld [vmem:[%s273 + $0x50] sm:$0xf]
          %v351 = vld [vmem:[%s273 + $0x54] sm:$0xf]
          %v352 = vld [vmem:[%s273 + $0x58] sm:$0xf]
          %v353 = vld [vmem:[%s273 + $0x5c] sm:$0xf]
          %v354 = vld [vmem:[%s273 + $0x60] sm:$0xf]
          %v355 = vld [vmem:[%s273 + $0x64] sm:$0xf]
          %v356 = vld [vmem:[%s273 + $0x68] sm:$0xf]
          %v357 = vld [vmem:[%s273 + $0x6c] sm:$0xf]
          %v358 = vld [vmem:[%s273 + $0x70] sm:$0xf]
          %v359 = vld [vmem:[%s273 + $0x74] sm:$0xf]
          %v360 = vld [vmem:[%s273 + $0x78] sm:$0xf]
          %v361 = vld [vmem:[%s273 + $0x7c] sm:$0xf]
          %v362 = vld [vmem:[#allocation6] sm:$0xf]
          %v363 = vld [vmem:[#allocation6 + $0x4] sm:$0xf]
          %v364 = vld [vmem:[#allocation6 + $0x8] sm:$0xf]
          %v365 = vld [vmem:[#allocation6 + $0xc] sm:$0xf]
          %v398 = vunpack.c.l.b16 %v330
          %v399 = vunpack.c.l.b16 %v331
          %v400 = vunpack.c.l.b16 %v332
          %v401 = vunpack.c.l.b16 %v333
          %v402 = vunpack.c.l.b16 %v334
          %v403 = vunpack.c.l.b16 %v335
          %v404 = vunpack.c.l.b16 %v336
          %v405 = vunpack.c.l.b16 %v337
          %v406 = vunpack.c.l.b16 %v338
          %v407 = vunpack.c.l.b16 %v339
          %v408 = vunpack.c.l.b16 %v340
          %v409 = vunpack.c.l.b16 %v341
          %v410 = vunpack.c.l.b16 %v342
          %v411 = vunpack.c.l.b16 %v343
          %v412 = vunpack.c.l.b16 %v344
          %v413 = vunpack.c.l.b16 %v345
          %v414 = vunpack.c.l.b16 %v346
          %v415 = vunpack.c.l.b16 %v347
          %v416 = vunpack.c.l.b16 %v348
          %v417 = vunpack.c.l.b16 %v349
          %v418 = vunpack.c.l.b16 %v350
          %v419 = vunpack.c.l.b16 %v351
          %v420 = vunpack.c.l.b16 %v352
          %v421 = vunpack.c.l.b16 %v353
          %v422 = vunpack.c.l.b16 %v354
          %v423 = vunpack.c.l.b16 %v355
          %v424 = vunpack.c.l.b16 %v356
          %v425 = vunpack.c.l.b16 %v357
          %v426 = vunpack.c.l.b16 %v358
          %v427 = vunpack.c.l.b16 %v359
          %v428 = vunpack.c.l.b16 %v360
          %v429 = vunpack.c.l.b16 %v361
          %v430 = vpack.c.b16 %v399, %v398
          %v431 = vpack.c.b16 %v401, %v400
          %v432 = vpack.c.b16 %v403, %v402
          %v433 = vpack.c.b16 %v405, %v404
          %v434 = vpack.c.b16 %v407, %v406
          %v435 = vpack.c.b16 %v409, %v408
          %v436 = vpack.c.b16 %v411, %v410
          %v437 = vpack.c.b16 %v413, %v412
          %v438 = vpack.c.b16 %v415, %v414
          %v439 = vpack.c.b16 %v417, %v416
          %v440 = vpack.c.b16 %v419, %v418
          %v441 = vpack.c.b16 %v421, %v420
          %v442 = vpack.c.b16 %v423, %v422
          %v443 = vpack.c.b16 %v425, %v424
          %v444 = vpack.c.b16 %v427, %v426
          %v445 = vpack.c.b16 %v429, %v428
          %v450 = vunpack.c.l.b16 %v362
          %v451 = vunpack.c.l.b16 %v363
          %v452 = vunpack.c.l.b16 %v364
          %v453 = vunpack.c.l.b16 %v365
          %v454 = vpack.c.b16 %v451, %v450
          %v455 = vpack.c.b16 %v453, %v452
          %vm458 = vcmask 261120
          %v460 = vsel %vm458, %v430, 0
          %v463 = vsel %vm458, %v431, 0
          %v466 = vsel %vm458, %v432, 0
          %v469 = vsel %vm458, %v433, 0
          %v472 = vsel %vm458, %v434, 0
          %v475 = vsel %vm458, %v435, 0
          %v478 = vsel %vm458, %v436, 0
          %v481 = vsel %vm458, %v437, 0
          %v484 = vsel %vm458, %v438, 0
          %v487 = vsel %vm458, %v439, 0
          %v490 = vsel %vm458, %v440, 0
          %v493 = vsel %vm458, %v441, 0
          %v496 = vsel %vm458, %v442, 0
          %v499 = vsel %vm458, %v443, 0
          %v502 = vsel %vm458, %v444, 0
          %v505 = vsel %vm458, %v445, 0
          %507 = vmatprep.subr.bf16.mxu0 0
          %508 = vmatpush1.bf16.msra.mxu0 0
          %509 = vmatprep.subr.bf16.mxu0 0
          %510 = vmatpush1.bf16.msra.mxu0 0
          %511 = vmatprep.subr.bf16.mxu0 0
          %512 = vmatpush1.bf16.msra.mxu0 0
          %513 = vmatprep.subr.bf16.mxu0 0
          %514 = vmatpush1.bf16.msra.mxu0 0
          %515 = vmatprep.subr.bf16.mxu0 0
          %516 = vmatpush1.bf16.msra.mxu0 0
          %517 = vmatprep.subr.bf16.mxu0 0
          %518 = vmatpush1.bf16.msra.mxu0 0
          %519 = vmatprep.subr.bf16.mxu0 0
          %520 = vmatpush1.bf16.msra.mxu0 %v455
          %521 = vmatprep.subr.bf16.mxu0 0
          %522 = vmatpush1.bf16.msra.mxu0 %v454
          %523 = vmatprep.subr.bf16.mxu0 0
          %524 = vmatpush2.bf16.msra.mxu0 0
          %525 = vmatprep.subr.bf16.mxu0 0
          %526 = vmatpush2.bf16.msra.mxu0 0
          %527 = vmatprep.subr.bf16.mxu0 0
          %528 = vmatpush2.bf16.msra.mxu0 0
          %529 = vmatprep.subr.bf16.mxu0 0
          %530 = vmatpush2.bf16.msra.mxu0 0
          %531 = vmatprep.subr.bf16.mxu0 0
          %532 = vmatpush2.bf16.msra.mxu0 0
          %533 = vmatprep.subr.bf16.mxu0 0
          %534 = vmatpush2.bf16.msra.mxu0 0
          %535 = vmatprep.subr.bf16.mxu0 0
          %536 = vmatpush2.bf16.msra.mxu0 0
          %537 = vmatprep.subr.bf16.mxu0 0
          %538 = vmatpush2.bf16.msra.mxu0 0
          %539 = vmatprep.mubr.bf16.mxu0 0
          %540 = vmatmul.mubr.bf16.gmra.mxu0 %v460
          %v541 = vpop.f32.mrf.mxu0
          %v542 = vadd.f32 0.0, %v541
          %v543 = vpop.f32.mrf.mxu0
          %v544 = vpop.f32.mrf.mxu0
          %v545 = vadd.f32 0.0, %v544
          %v546 = vpop.f32.mrf.mxu0
          %547 = vmatprep.mubr.bf16.mxu0 0
          %548 = vmatmul.mubr.bf16.gmra.mxu0 %v463
          %v549 = vpop.f32.mrf.mxu0
          %v550 = vadd.f32 0.0, %v549
          %v551 = vpop.f32.mrf.mxu0
          %v552 = vpop.f32.mrf.mxu0
          %v553 = vadd.f32 0.0, %v552
          %v554 = vpop.f32.mrf.mxu0
          %555 = vmatprep.mubr.bf16.mxu0 0
          %556 = vmatmul.mubr.bf16.gmra.mxu0 %v466
          %v557 = vpop.f32.mrf.mxu0
          %v558 = vadd.f32 0.0, %v557
          %v559 = vpop.f32.mrf.mxu0
          %v560 = vpop.f32.mrf.mxu0
          %v561 = vadd.f32 0.0, %v560
          %v562 = vpop.f32.mrf.mxu0
          %563 = vmatprep.mubr.bf16.mxu0 0
          %564 = vmatmul.mubr.bf16.gmra.mxu0 %v469
          %v565 = vpop.f32.mrf.mxu0
          %v566 = vadd.f32 0.0, %v565
          %v567 = vpop.f32.mrf.mxu0
          %v568 = vpop.f32.mrf.mxu0
          %v569 = vadd.f32 0.0, %v568
          %v570 = vpop.f32.mrf.mxu0
          %571 = vmatprep.mubr.bf16.mxu0 0
          %572 = vmatmul.mubr.bf16.gmra.mxu0 %v472
          %v573 = vpop.f32.mrf.mxu0
          %v574 = vadd.f32 0.0, %v573
          %v575 = vpop.f32.mrf.mxu0
          %v576 = vpop.f32.mrf.mxu0
          %v577 = vadd.f32 0.0, %v576
          %v578 = vpop.f32.mrf.mxu0
          %579 = vmatprep.mubr.bf16.mxu0 0
          %580 = vmatmul.mubr.bf16.gmra.mxu0 %v475
          %v581 = vpop.f32.mrf.mxu0
          %v582 = vadd.f32 0.0, %v581
          %v583 = vpop.f32.mrf.mxu0
          %v584 = vpop.f32.mrf.mxu0
          %v585 = vadd.f32 0.0, %v584
          %v586 = vpop.f32.mrf.mxu0
          %587 = vmatprep.mubr.bf16.mxu0 0
          %588 = vmatmul.mubr.bf16.gmra.mxu0 %v478
          %v589 = vpop.f32.mrf.mxu0
          %v590 = vadd.f32 0.0, %v589
          %v591 = vpop.f32.mrf.mxu0
          %v592 = vpop.f32.mrf.mxu0
          %v593 = vadd.f32 0.0, %v592
          %v594 = vpop.f32.mrf.mxu0
          %595 = vmatprep.mubr.bf16.mxu0 0
          %596 = vmatmul.mubr.bf16.gmra.mxu0 %v481
          %v597 = vpop.f32.mrf.mxu0
          %v598 = vadd.f32 0.0, %v597
          %v599 = vpop.f32.mrf.mxu0
          %v600 = vpop.f32.mrf.mxu0
          %v601 = vadd.f32 0.0, %v600
          %v602 = vpop.f32.mrf.mxu0
          %603 = vmatprep.mubr.bf16.mxu0 0
          %604 = vmatmul.mubr.bf16.gmra.mxu0 %v484
          %v605 = vpop.f32.mrf.mxu0
          %v606 = vadd.f32 0.0, %v605
          %v607 = vpop.f32.mrf.mxu0
          %v608 = vpop.f32.mrf.mxu0
          %v609 = vadd.f32 0.0, %v608
          %v610 = vpop.f32.mrf.mxu0
          %611 = vmatprep.mubr.bf16.mxu0 0
          %612 = vmatmul.mubr.bf16.gmra.mxu0 %v487
          %v613 = vpop.f32.mrf.mxu0
          %v614 = vadd.f32 0.0, %v613
          %v615 = vpop.f32.mrf.mxu0
          %v616 = vpop.f32.mrf.mxu0
          %v617 = vadd.f32 0.0, %v616
          %v618 = vpop.f32.mrf.mxu0
          %619 = vmatprep.mubr.bf16.mxu0 0
          %620 = vmatmul.mubr.bf16.gmra.mxu0 %v490
          %v621 = vpop.f32.mrf.mxu0
          %v622 = vadd.f32 0.0, %v621
          %v623 = vpop.f32.mrf.mxu0
          %v624 = vpop.f32.mrf.mxu0
          %v625 = vadd.f32 0.0, %v624
          %v626 = vpop.f32.mrf.mxu0
          %627 = vmatprep.mubr.bf16.mxu0 0
          %628 = vmatmul.mubr.bf16.gmra.mxu0 %v493
          %v629 = vpop.f32.mrf.mxu0
          %v630 = vadd.f32 0.0, %v629
          %v631 = vpop.f32.mrf.mxu0
          %v632 = vpop.f32.mrf.mxu0
          %v633 = vadd.f32 0.0, %v632
          %v634 = vpop.f32.mrf.mxu0
          %635 = vmatprep.mubr.bf16.mxu0 0
          %636 = vmatmul.mubr.bf16.gmra.mxu0 %v496
          %v637 = vpop.f32.mrf.mxu0
          %v638 = vadd.f32 0.0, %v637
          %v639 = vpop.f32.mrf.mxu0
          %v640 = vpop.f32.mrf.mxu0
          %v641 = vadd.f32 0.0, %v640
          %v642 = vpop.f32.mrf.mxu0
          %643 = vmatprep.mubr.bf16.mxu0 0
          %644 = vmatmul.mubr.bf16.gmra.mxu0 %v499
          %v645 = vpop.f32.mrf.mxu0
          %v646 = vadd.f32 0.0, %v645
          %v647 = vpop.f32.mrf.mxu0
          %v648 = vpop.f32.mrf.mxu0
          %v649 = vadd.f32 0.0, %v648
          %v650 = vpop.f32.mrf.mxu0
          %651 = vmatprep.mubr.bf16.mxu0 0
          %652 = vmatmul.mubr.bf16.gmra.mxu0 %v502
          %v653 = vpop.f32.mrf.mxu0
          %v654 = vadd.f32 0.0, %v653
          %v655 = vpop.f32.mrf.mxu0
          %v656 = vpop.f32.mrf.mxu0
          %v657 = vadd.f32 0.0, %v656
          %v658 = vpop.f32.mrf.mxu0
          %659 = vmatprep.mubr.bf16.mxu0 0
          %660 = vmatmul.mubr.bf16.gmra.mxu0 %v505
          %v661 = vpop.f32.mrf.mxu0
          %v662 = vadd.f32 0.0, %v661
          %v663 = vpop.f32.mrf.mxu0
          %v664 = vpop.f32.mrf.mxu0
          %v665 = vadd.f32 0.0, %v664
          %v666 = vpop.f32.mrf.mxu0
          %667 = vdwg.mxu0
          %700 = vrot.lane.b32.xlu0 %v542, 96
          %v701 = vpop.permute.xlu0 %700
          %702 = vrot.lane.b32.xlu0 %v545, 96
          %v703 = vpop.permute.xlu0 %702
          %704 = vrot.lane.b32.xlu0 %v550, 96
          %v705 = vpop.permute.xlu0 %704
          %706 = vrot.lane.b32.xlu0 %v553, 96
          %v707 = vpop.permute.xlu0 %706
          %708 = vrot.lane.b32.xlu0 %v558, 96
          %v709 = vpop.permute.xlu0 %708
          %710 = vrot.lane.b32.xlu0 %v561, 96
          %v711 = vpop.permute.xlu0 %710
          %712 = vrot.lane.b32.xlu0 %v566, 96
          %v713 = vpop.permute.xlu0 %712
          %714 = vrot.lane.b32.xlu0 %v569, 96
          %v715 = vpop.permute.xlu0 %714
          %716 = vrot.lane.b32.xlu0 %v574, 96
          %v717 = vpop.permute.xlu0 %716
          %718 = vrot.lane.b32.xlu0 %v577, 96
          %v719 = vpop.permute.xlu0 %718
          %720 = vrot.lane.b32.xlu0 %v582, 96
          %v721 = vpop.permute.xlu0 %720
          %722 = vrot.lane.b32.xlu0 %v585, 96
          %v723 = vpop.permute.xlu0 %722
          %724 = vrot.lane.b32.xlu0 %v590, 96
          %v725 = vpop.permute.xlu0 %724
          %726 = vrot.lane.b32.xlu0 %v593, 96
          %v727 = vpop.permute.xlu0 %726
          %728 = vrot.lane.b32.xlu0 %v598, 96
          %v729 = vpop.permute.xlu0 %728
          %730 = vrot.lane.b32.xlu0 %v601, 96
          %v731 = vpop.permute.xlu0 %730
          %732 = vrot.lane.b32.xlu0 %v606, 96
          %v733 = vpop.permute.xlu0 %732
          %734 = vrot.lane.b32.xlu0 %v609, 96
          %v735 = vpop.permute.xlu0 %734
          %736 = vrot.lane.b32.xlu0 %v614, 96
          %v737 = vpop.permute.xlu0 %736
          %738 = vrot.lane.b32.xlu0 %v617, 96
          %v739 = vpop.permute.xlu0 %738
          %740 = vrot.lane.b32.xlu0 %v622, 96
          %v741 = vpop.permute.xlu0 %740
          %742 = vrot.lane.b32.xlu0 %v625, 96
          %v743 = vpop.permute.xlu0 %742
          %744 = vrot.lane.b32.xlu0 %v630, 96
          %v745 = vpop.permute.xlu0 %744
          %746 = vrot.lane.b32.xlu0 %v633, 96
          %v747 = vpop.permute.xlu0 %746
          %748 = vrot.lane.b32.xlu0 %v638, 96
          %v749 = vpop.permute.xlu0 %748
          %750 = vrot.lane.b32.xlu0 %v641, 96
          %v751 = vpop.permute.xlu0 %750
          %752 = vrot.lane.b32.xlu0 %v646, 96
          %v753 = vpop.permute.xlu0 %752
          %754 = vrot.lane.b32.xlu0 %v649, 96
          %v755 = vpop.permute.xlu0 %754
          %756 = vrot.lane.b32.xlu0 %v654, 96
          %v757 = vpop.permute.xlu0 %756
          %758 = vrot.lane.b32.xlu0 %v657, 96
          %v759 = vpop.permute.xlu0 %758
          %760 = vrot.lane.b32.xlu0 %v662, 96
          %v761 = vpop.permute.xlu0 %760
          %762 = vrot.lane.b32.xlu0 %v665, 96
          %v763 = vpop.permute.xlu0 %762
          %v796 = vrot.slane %v701, 1
          %v797 = vrot.slane %v703, 1
          %v798 = vrot.slane %v705, 1
          %v799 = vrot.slane %v707, 1
          %v800 = vrot.slane %v709, 1
          %v801 = vrot.slane %v711, 1
          %v802 = vrot.slane %v713, 1
          %v803 = vrot.slane %v715, 1
          %v804 = vrot.slane %v717, 1
          %v805 = vrot.slane %v719, 1
          %v806 = vrot.slane %v721, 1
          %v807 = vrot.slane %v723, 1
          %v808 = vrot.slane %v725, 1
          %v809 = vrot.slane %v727, 1
          %v810 = vrot.slane %v729, 1
          %v811 = vrot.slane %v731, 1
          %v812 = vrot.slane %v733, 1
          %v813 = vrot.slane %v735, 1
          %v814 = vrot.slane %v737, 1
          %v815 = vrot.slane %v739, 1
          %v816 = vrot.slane %v741, 1
          %v817 = vrot.slane %v743, 1
          %v818 = vrot.slane %v745, 1
          %v819 = vrot.slane %v747, 1
          %v820 = vrot.slane %v749, 1
          %v821 = vrot.slane %v751, 1
          %v822 = vrot.slane %v753, 1
          %v823 = vrot.slane %v755, 1
          %v824 = vrot.slane %v757, 1
          %v825 = vrot.slane %v759, 1
          %v826 = vrot.slane %v761, 1
          %v827 = vrot.slane %v763, 1
          %v828 = vlaneseq
          %v829 = vshrl.u32 %v828, 7
          %vm830 = vcmp.lt.s32.totalorder %v829, 7
          %v831 = vsel %vm830, %v826, %v827
          %v832 = vsel %vm830, %v825, %v826
          %v833 = vsel %vm830, %v824, %v825
          %v834 = vsel %vm830, %v823, %v824
          %v835 = vsel %vm830, %v822, %v823
          %v836 = vsel %vm830, %v821, %v822
          %v837 = vsel %vm830, %v820, %v821
          %v838 = vsel %vm830, %v819, %v820
          %v839 = vsel %vm830, %v818, %v819
          %v840 = vsel %vm830, %v817, %v818
          %v841 = vsel %vm830, %v816, %v817
          %v842 = vsel %vm830, %v815, %v816
          %v843 = vsel %vm830, %v814, %v815
          %v844 = vsel %vm830, %v813, %v814
          %v845 = vsel %vm830, %v812, %v813
          %v846 = vsel %vm830, %v811, %v812
          %v847 = vsel %vm830, %v810, %v811
          %v848 = vsel %vm830, %v809, %v810
          %v849 = vsel %vm830, %v808, %v809
          %v850 = vsel %vm830, %v807, %v808
          %v851 = vsel %vm830, %v806, %v807
          %v852 = vsel %vm830, %v805, %v806
          %v853 = vsel %vm830, %v804, %v805
          %v854 = vsel %vm830, %v803, %v804
          %v855 = vsel %vm830, %v802, %v803
          %v856 = vsel %vm830, %v801, %v802
          %v857 = vsel %vm830, %v800, %v801
          %v858 = vsel %vm830, %v799, %v800
          %v859 = vsel %vm830, %v798, %v799
          %v860 = vsel %vm830, %v797, %v798
          %v861 = vsel %vm830, %v796, %v797
          %v862 = vsel %vm830, %v827, %v796
          %v863 = vadd.f32 %v542, %v861
          %v864 = vadd.f32 %v545, %v860
          %v865 = vadd.f32 %v550, %v859
          %v866 = vadd.f32 %v553, %v858
          %v867 = vadd.f32 %v558, %v857
          %v868 = vadd.f32 %v561, %v856
          %v869 = vadd.f32 %v566, %v855
          %v870 = vadd.f32 %v569, %v854
          %v871 = vadd.f32 %v574, %v853
          %v872 = vadd.f32 %v577, %v852
          %v873 = vadd.f32 %v582, %v851
          %v874 = vadd.f32 %v585, %v850
          %v875 = vadd.f32 %v590, %v849
          %v876 = vadd.f32 %v593, %v848
          %v877 = vadd.f32 %v598, %v847
          %v878 = vadd.f32 %v601, %v846
          %v879 = vadd.f32 %v606, %v845
          %v880 = vadd.f32 %v609, %v844
          %v881 = vadd.f32 %v614, %v843
          %v882 = vadd.f32 %v617, %v842
          %v883 = vadd.f32 %v622, %v841
          %v884 = vadd.f32 %v625, %v840
          %v885 = vadd.f32 %v630, %v839
          %v886 = vadd.f32 %v633, %v838
          %v887 = vadd.f32 %v638, %v837
          %v888 = vadd.f32 %v641, %v836
          %v889 = vadd.f32 %v646, %v835
          %v890 = vadd.f32 %v649, %v834
          %v891 = vadd.f32 %v654, %v833
          %v892 = vadd.f32 %v657, %v832
          %v893 = vadd.f32 %v662, %v831
          %v894 = vadd.f32 %v665, %v862
          %895 = vrot.lane.b32.xlu0 %v542, 64
          %v896 = vpop.permute.xlu0 %895
          %897 = vrot.lane.b32.xlu0 %v545, 64
          %v898 = vpop.permute.xlu0 %897
          %899 = vrot.lane.b32.xlu0 %v550, 64
          %v900 = vpop.permute.xlu0 %899
          %901 = vrot.lane.b32.xlu0 %v553, 64
          %v902 = vpop.permute.xlu0 %901
          %903 = vrot.lane.b32.xlu0 %v558, 64
          %v904 = vpop.permute.xlu0 %903
          %905 = vrot.lane.b32.xlu0 %v561, 64
          %v906 = vpop.permute.xlu0 %905
          %907 = vrot.lane.b32.xlu0 %v566, 64
          %v908 = vpop.permute.xlu0 %907
          %909 = vrot.lane.b32.xlu0 %v569, 64
          %v910 = vpop.permute.xlu0 %909
          %911 = vrot.lane.b32.xlu0 %v574, 64
          %v912 = vpop.permute.xlu0 %911
          %913 = vrot.lane.b32.xlu0 %v577, 64
          %v914 = vpop.permute.xlu0 %913
          %915 = vrot.lane.b32.xlu0 %v582, 64
          %v916 = vpop.permute.xlu0 %915
          %917 = vrot.lane.b32.xlu0 %v585, 64
          %v918 = vpop.permute.xlu0 %917
          %919 = vrot.lane.b32.xlu0 %v590, 64
          %v920 = vpop.permute.xlu0 %919
          %921 = vrot.lane.b32.xlu0 %v593, 64
          %v922 = vpop.permute.xlu0 %921
          %923 = vrot.lane.b32.xlu0 %v598, 64
          %v924 = vpop.permute.xlu0 %923
          %925 = vrot.lane.b32.xlu0 %v601, 64
          %v926 = vpop.permute.xlu0 %925
          %927 = vrot.lane.b32.xlu0 %v606, 64
          %v928 = vpop.permute.xlu0 %927
          %929 = vrot.lane.b32.xlu0 %v609, 64
          %v930 = vpop.permute.xlu0 %929
          %931 = vrot.lane.b32.xlu0 %v614, 64
          %v932 = vpop.permute.xlu0 %931
          %933 = vrot.lane.b32.xlu0 %v617, 64
          %v934 = vpop.permute.xlu0 %933
          %935 = vrot.lane.b32.xlu0 %v622, 64
          %v936 = vpop.permute.xlu0 %935
          %937 = vrot.lane.b32.xlu0 %v625, 64
          %v938 = vpop.permute.xlu0 %937
          %939 = vrot.lane.b32.xlu0 %v630, 64
          %v940 = vpop.permute.xlu0 %939
          %941 = vrot.lane.b32.xlu0 %v633, 64
          %v942 = vpop.permute.xlu0 %941
          %943 = vrot.lane.b32.xlu0 %v638, 64
          %v944 = vpop.permute.xlu0 %943
          %945 = vrot.lane.b32.xlu0 %v641, 64
          %v946 = vpop.permute.xlu0 %945
          %947 = vrot.lane.b32.xlu0 %v646, 64
          %v948 = vpop.permute.xlu0 %947
          %949 = vrot.lane.b32.xlu0 %v649, 64
          %v950 = vpop.permute.xlu0 %949
          %951 = vrot.lane.b32.xlu0 %v654, 64
          %v952 = vpop.permute.xlu0 %951
          %953 = vrot.lane.b32.xlu0 %v657, 64
          %v954 = vpop.permute.xlu0 %953
          %955 = vrot.lane.b32.xlu0 %v662, 64
          %v956 = vpop.permute.xlu0 %955
          %957 = vrot.lane.b32.xlu0 %v665, 64
          %v958 = vpop.permute.xlu0 %957
          %v991 = vrot.slane %v896, 2
          %v992 = vrot.slane %v898, 2
          %v993 = vrot.slane %v900, 2
          %v994 = vrot.slane %v902, 2
          %v995 = vrot.slane %v904, 2
          %v996 = vrot.slane %v906, 2
          %v997 = vrot.slane %v908, 2
          %v998 = vrot.slane %v910, 2
          %v999 = vrot.slane %v912, 2
          %v1000 = vrot.slane %v914, 2
          %v1001 = vrot.slane %v916, 2
          %v1002 = vrot.slane %v918, 2
          %v1003 = vrot.slane %v920, 2
          %v1004 = vrot.slane %v922, 2
          %v1005 = vrot.slane %v924, 2
          %v1006 = vrot.slane %v926, 2
          %v1007 = vrot.slane %v928, 2
          %v1008 = vrot.slane %v930, 2
          %v1009 = vrot.slane %v932, 2
          %v1010 = vrot.slane %v934, 2
          %v1011 = vrot.slane %v936, 2
          %v1012 = vrot.slane %v938, 2
          %v1013 = vrot.slane %v940, 2
          %v1014 = vrot.slane %v942, 2
          %v1015 = vrot.slane %v944, 2
          %v1016 = vrot.slane %v946, 2
          %v1017 = vrot.slane %v948, 2
          %v1018 = vrot.slane %v950, 2
          %v1019 = vrot.slane %v952, 2
          %v1020 = vrot.slane %v954, 2
          %v1021 = vrot.slane %v956, 2
          %v1022 = vrot.slane %v958, 2
          %vm1023 = vcmp.lt.s32.totalorder %v829, 6
          %v1024 = vsel %vm1023, %v1021, %v1022
          %v1025 = vsel %vm1023, %v1020, %v1021
          %v1026 = vsel %vm1023, %v1019, %v1020
          %v1027 = vsel %vm1023, %v1018, %v1019
          %v1028 = vsel %vm1023, %v1017, %v1018
          %v1029 = vsel %vm1023, %v1016, %v1017
          %v1030 = vsel %vm1023, %v1015, %v1016
          %v1031 = vsel %vm1023, %v1014, %v1015
          %v1032 = vsel %vm1023, %v1013, %v1014
          %v1033 = vsel %vm1023, %v1012, %v1013
          %v1034 = vsel %vm1023, %v1011, %v1012
          %v1035 = vsel %vm1023, %v1010, %v1011
          %v1036 = vsel %vm1023, %v1009, %v1010
          %v1037 = vsel %vm1023, %v1008, %v1009
          %v1038 = vsel %vm1023, %v1007, %v1008
          %v1039 = vsel %vm1023, %v1006, %v1007
          %v1040 = vsel %vm1023, %v1005, %v1006
          %v1041 = vsel %vm1023, %v1004, %v1005
          %v1042 = vsel %vm1023, %v1003, %v1004
          %v1043 = vsel %vm1023, %v1002, %v1003
          %v1044 = vsel %vm1023, %v1001, %v1002
          %v1045 = vsel %vm1023, %v1000, %v1001
          %v1046 = vsel %vm1023, %v999, %v1000
          %v1047 = vsel %vm1023, %v998, %v999
          %v1048 = vsel %vm1023, %v997, %v998
          %v1049 = vsel %vm1023, %v996, %v997
          %v1050 = vsel %vm1023, %v995, %v996
          %v1051 = vsel %vm1023, %v994, %v995
          %v1052 = vsel %vm1023, %v993, %v994
          %v1053 = vsel %vm1023, %v992, %v993
          %v1054 = vsel %vm1023, %v991, %v992
          %v1055 = vsel %vm1023, %v1022, %v991
          %v1056 = vadd.f32 %v863, %v1054
          %v1057 = vadd.f32 %v864, %v1053
          %v1058 = vadd.f32 %v865, %v1052
          %v1059 = vadd.f32 %v866, %v1051
          %v1060 = vadd.f32 %v867, %v1050
          %v1061 = vadd.f32 %v868, %v1049
          %v1062 = vadd.f32 %v869, %v1048
          %v1063 = vadd.f32 %v870, %v1047
          %v1064 = vadd.f32 %v871, %v1046
          %v1065 = vadd.f32 %v872, %v1045
          %v1066 = vadd.f32 %v873, %v1044
          %v1067 = vadd.f32 %v874, %v1043
          %v1068 = vadd.f32 %v875, %v1042
          %v1069 = vadd.f32 %v876, %v1041
          %v1070 = vadd.f32 %v877, %v1040
          %v1071 = vadd.f32 %v878, %v1039
          %v1072 = vadd.f32 %v879, %v1038
          %v1073 = vadd.f32 %v880, %v1037
          %v1074 = vadd.f32 %v881, %v1036
          %v1075 = vadd.f32 %v882, %v1035
          %v1076 = vadd.f32 %v883, %v1034
          %v1077 = vadd.f32 %v884, %v1033
          %v1078 = vadd.f32 %v885, %v1032
          %v1079 = vadd.f32 %v886, %v1031
          %v1080 = vadd.f32 %v887, %v1030
          %v1081 = vadd.f32 %v888, %v1029
          %v1082 = vadd.f32 %v889, %v1028
          %v1083 = vadd.f32 %v890, %v1027
          %v1084 = vadd.f32 %v891, %v1026
          %v1085 = vadd.f32 %v892, %v1025
          %v1086 = vadd.f32 %v893, %v1024
          %v1087 = vadd.f32 %v894, %v1055
          %v1088 = vld [vmem:[%s2] sm:$0x1]
          %v1090 = vlaneseq
          %v1091 = vshrl.u32 %v1090, 7
          %v1092 = vsub.s32 0, %v1091
          %v1093 = vrot.slane %v1088, %v1092
          %v1095 = vadd.f32 %v1056, %v1093
          %v1096 = vadd.f32 %v1057, %v1093
          %v1097 = vadd.f32 %v1058, %v1093
          %v1098 = vadd.f32 %v1059, %v1093
          %v1099 = vadd.f32 %v1060, %v1093
          %v1100 = vadd.f32 %v1061, %v1093
          %v1101 = vadd.f32 %v1062, %v1093
          %v1102 = vadd.f32 %v1063, %v1093
          %v1103 = vadd.f32 %v1064, %v1093
          %v1104 = vadd.f32 %v1065, %v1093
          %v1105 = vadd.f32 %v1066, %v1093
          %v1106 = vadd.f32 %v1067, %v1093
          %v1107 = vadd.f32 %v1068, %v1093
          %v1108 = vadd.f32 %v1069, %v1093
          %v1109 = vadd.f32 %v1070, %v1093
          %v1110 = vadd.f32 %v1071, %v1093
          %v1111 = vadd.f32 %v1072, %v1093
          %v1112 = vadd.f32 %v1073, %v1093
          %v1113 = vadd.f32 %v1074, %v1093
          %v1114 = vadd.f32 %v1075, %v1093
          %v1115 = vadd.f32 %v1076, %v1093
          %v1116 = vadd.f32 %v1077, %v1093
          %v1117 = vadd.f32 %v1078, %v1093
          %v1118 = vadd.f32 %v1079, %v1093
          %v1119 = vadd.f32 %v1080, %v1093
          %v1120 = vadd.f32 %v1081, %v1093
          %v1121 = vadd.f32 %v1082, %v1093
          %v1122 = vadd.f32 %v1083, %v1093
          %v1123 = vadd.f32 %v1084, %v1093
          %v1124 = vadd.f32 %v1085, %v1093
          %v1125 = vadd.f32 %v1086, %v1093
          %v1126 = vadd.f32 %v1087, %v1093
          %v1127 = vtanh.pop %v1095
          %v1128 = vtanh.pop %v1096
          %v1129 = vtanh.pop %v1097
          %v1130 = vtanh.pop %v1098
          %v1131 = vtanh.pop %v1099
          %v1132 = vtanh.pop %v1100
          %v1133 = vtanh.pop %v1101
          %v1134 = vtanh.pop %v1102
          %v1135 = vtanh.pop %v1103
          %v1136 = vtanh.pop %v1104
          %v1137 = vtanh.pop %v1105
          %v1138 = vtanh.pop %v1106
          %v1139 = vtanh.pop %v1107
          %v1140 = vtanh.pop %v1108
          %v1141 = vtanh.pop %v1109
          %v1142 = vtanh.pop %v1110
          %v1143 = vtanh.pop %v1111
          %v1144 = vtanh.pop %v1112
          %v1145 = vtanh.pop %v1113
          %v1146 = vtanh.pop %v1114
          %v1147 = vtanh.pop %v1115
          %v1148 = vtanh.pop %v1116
          %v1149 = vtanh.pop %v1117
          %v1150 = vtanh.pop %v1118
          %v1151 = vtanh.pop %v1119
          %v1152 = vtanh.pop %v1120
          %v1153 = vtanh.pop %v1121
          %v1154 = vtanh.pop %v1122
          %v1155 = vtanh.pop %v1123
          %v1156 = vtanh.pop %v1124
          %v1157 = vtanh.pop %v1125
          %v1158 = vtanh.pop %v1126
          %v1159 = vpack.c.bf16 %v1128, %v1127
          %v1160 = vpack.c.bf16 %v1130, %v1129
          %v1161 = vpack.c.bf16 %v1132, %v1131
          %v1162 = vpack.c.bf16 %v1134, %v1133
          %v1163 = vpack.c.bf16 %v1136, %v1135
          %v1164 = vpack.c.bf16 %v1138, %v1137
          %v1165 = vpack.c.bf16 %v1140, %v1139
          %v1166 = vpack.c.bf16 %v1142, %v1141
          %v1167 = vpack.c.bf16 %v1144, %v1143
          %v1168 = vpack.c.bf16 %v1146, %v1145
          %v1169 = vpack.c.bf16 %v1148, %v1147
          %v1170 = vpack.c.bf16 %v1150, %v1149
          %v1171 = vpack.c.bf16 %v1152, %v1151
          %v1172 = vpack.c.bf16 %v1154, %v1153
          %v1173 = vpack.c.bf16 %v1156, %v1155
          %v1174 = vpack.c.bf16 %v1158, %v1157
          %v1191 = vunpack.c.l.b16 %v1159
          %v1192 = vunpack.c.h.b16 %v1159
          %v1193 = vunpack.c.l.b16 %v1160
          %v1194 = vunpack.c.h.b16 %v1160
          %v1195 = vunpack.c.l.b16 %v1161
          %v1196 = vunpack.c.h.b16 %v1161
          %v1197 = vunpack.c.l.b16 %v1162
          %v1198 = vunpack.c.h.b16 %v1162
          %v1199 = vunpack.c.l.b16 %v1163
          %v1200 = vunpack.c.h.b16 %v1163
          %v1201 = vunpack.c.l.b16 %v1164
          %v1202 = vunpack.c.h.b16 %v1164
          %v1203 = vunpack.c.l.b16 %v1165
          %v1204 = vunpack.c.h.b16 %v1165
          %v1205 = vunpack.c.l.b16 %v1166
          %v1206 = vunpack.c.h.b16 %v1166
          %v1207 = vunpack.c.l.b16 %v1167
          %v1208 = vunpack.c.h.b16 %v1167
          %v1209 = vunpack.c.l.b16 %v1168
          %v1210 = vunpack.c.h.b16 %v1168
          %v1211 = vunpack.c.l.b16 %v1169
          %v1212 = vunpack.c.h.b16 %v1169
          %v1213 = vunpack.c.l.b16 %v1170
          %v1214 = vunpack.c.h.b16 %v1170
          %v1215 = vunpack.c.l.b16 %v1171
          %v1216 = vunpack.c.h.b16 %v1171
          %v1217 = vunpack.c.l.b16 %v1172
          %v1218 = vunpack.c.h.b16 %v1172
          %v1219 = vunpack.c.l.b16 %v1173
          %v1220 = vunpack.c.h.b16 %v1173
          %v1221 = vunpack.c.l.b16 %v1174
          %v1222 = vunpack.c.h.b16 %v1174
          %v1223 = vpack.c.b16 %v1191, %v1191
          %v1224 = vpack.c.b16 %v1192, %v1192
          %v1225 = vpack.c.b16 %v1193, %v1193
          %v1226 = vpack.c.b16 %v1194, %v1194
          %v1227 = vpack.c.b16 %v1195, %v1195
          %v1228 = vpack.c.b16 %v1196, %v1196
          %v1229 = vpack.c.b16 %v1197, %v1197
          %v1230 = vpack.c.b16 %v1198, %v1198
          %v1231 = vpack.c.b16 %v1199, %v1199
          %v1232 = vpack.c.b16 %v1200, %v1200
          %v1233 = vpack.c.b16 %v1201, %v1201
          %v1234 = vpack.c.b16 %v1202, %v1202
          %v1235 = vpack.c.b16 %v1203, %v1203
          %v1236 = vpack.c.b16 %v1204, %v1204
          %v1237 = vpack.c.b16 %v1205, %v1205
          %v1238 = vpack.c.b16 %v1206, %v1206
          %v1239 = vpack.c.b16 %v1207, %v1207
          %v1240 = vpack.c.b16 %v1208, %v1208
          %v1241 = vpack.c.b16 %v1209, %v1209
          %v1242 = vpack.c.b16 %v1210, %v1210
          %v1243 = vpack.c.b16 %v1211, %v1211
          %v1244 = vpack.c.b16 %v1212, %v1212
          %v1245 = vpack.c.b16 %v1213, %v1213
          %v1246 = vpack.c.b16 %v1214, %v1214
          %v1247 = vpack.c.b16 %v1215, %v1215
          %v1248 = vpack.c.b16 %v1216, %v1216
          %v1249 = vpack.c.b16 %v1217, %v1217
          %v1250 = vpack.c.b16 %v1218, %v1218
          %v1251 = vpack.c.b16 %v1219, %v1219
          %v1252 = vpack.c.b16 %v1220, %v1220
          %v1253 = vpack.c.b16 %v1221, %v1221
          %v1254 = vpack.c.b16 %v1222, %v1222
          %vm1287 = vcmask 257024
          %1288 = vst.msk [vmem:[#allocation2] sm:$0xf] %vm1287, %v1223
          %1289 = vst.msk [vmem:[#allocation2 + $0x4] sm:$0xf] %vm1287, %v1224
          %1290 = vst.msk [vmem:[#allocation2 + $0x8] sm:$0xf] %vm1287, %v1225
          %1291 = vst.msk [vmem:[#allocation2 + $0xc] sm:$0xf] %vm1287, %v1226
          %1292 = vst.msk [vmem:[#allocation2 + $0x10] sm:$0xf] %vm1287, %v1227
          %1293 = vst.msk [vmem:[#allocation2 + $0x14] sm:$0xf] %vm1287, %v1228
          %1294 = vst.msk [vmem:[#allocation2 + $0x18] sm:$0xf] %vm1287, %v1229
          %1295 = vst.msk [vmem:[#allocation2 + $0x1c] sm:$0xf] %vm1287, %v1230
          %1296 = vst.msk [vmem:[#allocation2 + $0x20] sm:$0xf] %vm1287, %v1231
          %1297 = vst.msk [vmem:[#allocation2 + $0x24] sm:$0xf] %vm1287, %v1232
          %1298 = vst.msk [vmem:[#allocation2 + $0x28] sm:$0xf] %vm1287, %v1233
          %1299 = vst.msk [vmem:[#allocation2 + $0x2c] sm:$0xf] %vm1287, %v1234
          %1300 = vst.msk [vmem:[#allocation2 + $0x30] sm:$0xf] %vm1287, %v1235
          %1301 = vst.msk [vmem:[#allocation2 + $0x34] sm:$0xf] %vm1287, %v1236
          %1302 = vst.msk [vmem:[#allocation2 + $0x38] sm:$0xf] %vm1287, %v1237
          %1303 = vst.msk [vmem:[#allocation2 + $0x3c] sm:$0xf] %vm1287, %v1238
          %1304 = vst.msk [vmem:[#allocation2 + $0x40] sm:$0xf] %vm1287, %v1239
          %1305 = vst.msk [vmem:[#allocation2 + $0x44] sm:$0xf] %vm1287, %v1240
          %1306 = vst.msk [vmem:[#allocation2 + $0x48] sm:$0xf] %vm1287, %v1241
          %1307 = vst.msk [vmem:[#allocation2 + $0x4c] sm:$0xf] %vm1287, %v1242
          %1308 = vst.msk [vmem:[#allocation2 + $0x50] sm:$0xf] %vm1287, %v1243
          %1309 = vst.msk [vmem:[#allocation2 + $0x54] sm:$0xf] %vm1287, %v1244
          %1310 = vst.msk [vmem:[#allocation2 + $0x58] sm:$0xf] %vm1287, %v1245
          %1311 = vst.msk [vmem:[#allocation2 + $0x5c] sm:$0xf] %vm1287, %v1246
          %1312 = vst.msk [vmem:[#allocation2 + $0x60] sm:$0xf] %vm1287, %v1247
          %1313 = vst.msk [vmem:[#allocation2 + $0x64] sm:$0xf] %vm1287, %v1248
          %1314 = vst.msk [vmem:[#allocation2 + $0x68] sm:$0xf] %vm1287, %v1249
          %1315 = vst.msk [vmem:[#allocation2 + $0x6c] sm:$0xf] %vm1287, %v1250
          %1316 = vst.msk [vmem:[#allocation2 + $0x70] sm:$0xf] %vm1287, %v1251
          %1317 = vst.msk [vmem:[#allocation2 + $0x74] sm:$0xf] %vm1287, %v1252
          %1318 = vst.msk [vmem:[#allocation2 + $0x78] sm:$0xf] %vm1287, %v1253
          %1319 = vst.msk [vmem:[#allocation2 + $0x7c] sm:$0xf] %vm1287, %v1254
        $region56: #{tpu_custom_call.1} parent=39 // pred_fallthru
          _
        %v1320 = vld [vmem:[#allocation2] sm:$0xf]
        %v1321 = vld [vmem:[#allocation2 + $0x4] sm:$0xf]
        %v1322 = vld [vmem:[#allocation2 + $0x8] sm:$0xf]
        %v1323 = vld [vmem:[#allocation2 + $0xc] sm:$0xf]
        %v1324 = vld [vmem:[#allocation2 + $0x10] sm:$0xf]
        %v1325 = vld [vmem:[#allocation2 + $0x14] sm:$0xf]
        %v1326 = vld [vmem:[#allocation2 + $0x18] sm:$0xf]
        %v1327 = vld [vmem:[#allocation2 + $0x1c] sm:$0xf]
        %v1328 = vld [vmem:[#allocation2 + $0x20] sm:$0xf]
        %v1329 = vld [vmem:[#allocation2 + $0x24] sm:$0xf]
        %v1330 = vld [vmem:[#allocation2 + $0x28] sm:$0xf]
        %v1331 = vld [vmem:[#allocation2 + $0x2c] sm:$0xf]
        %v1332 = vld [vmem:[#allocation2 + $0x30] sm:$0xf]
        %v1333 = vld [vmem:[#allocation2 + $0x34] sm:$0xf]
        %v1334 = vld [vmem:[#allocation2 + $0x38] sm:$0xf]
        %v1335 = vld [vmem:[#allocation2 + $0x3c] sm:$0xf]
        %v1336 = vld [vmem:[#allocation2 + $0x40] sm:$0xf]
        %v1337 = vld [vmem:[#allocation2 + $0x44] sm:$0xf]
        %v1338 = vld [vmem:[#allocation2 + $0x48] sm:$0xf]
        %v1339 = vld [vmem:[#allocation2 + $0x4c] sm:$0xf]
        %v1340 = vld [vmem:[#allocation2 + $0x50] sm:$0xf]
        %v1341 = vld [vmem:[#allocation2 + $0x54] sm:$0xf]
        %v1342 = vld [vmem:[#allocation2 + $0x58] sm:$0xf]
        %v1343 = vld [vmem:[#allocation2 + $0x5c] sm:$0xf]
        %v1344 = vld [vmem:[#allocation2 + $0x60] sm:$0xf]
        %v1345 = vld [vmem:[#allocation2 + $0x64] sm:$0xf]
        %v1346 = vld [vmem:[#allocation2 + $0x68] sm:$0xf]
        %v1347 = vld [vmem:[#allocation2 + $0x6c] sm:$0xf]
        %v1348 = vld [vmem:[#allocation2 + $0x70] sm:$0xf]
        %v1349 = vld [vmem:[#allocation2 + $0x74] sm:$0xf]
        %v1350 = vld [vmem:[#allocation2 + $0x78] sm:$0xf]
        %v1351 = vld [vmem:[#allocation2 + $0x7c] sm:$0xf]
        %v1352 = vld [vmem:[%s286] sm:$0xff]
        %v1353 = vld [vmem:[%s286 + $0x8] sm:$0xff]
        %v1354 = vld [vmem:[%s286 + $0x10] sm:$0xff]
        %v1355 = vld [vmem:[%s286 + $0x18] sm:$0xff]
        %v1388 = vunpack.c.l.b16 %v1320
        %v1389 = vunpack.c.l.b16 %v1321
        %v1390 = vunpack.c.l.b16 %v1322
        %v1391 = vunpack.c.l.b16 %v1323
        %v1392 = vunpack.c.l.b16 %v1324
        %v1393 = vunpack.c.l.b16 %v1325
        %v1394 = vunpack.c.l.b16 %v1326
        %v1395 = vunpack.c.l.b16 %v1327
        %v1396 = vunpack.c.l.b16 %v1328
        %v1397 = vunpack.c.l.b16 %v1329
        %v1398 = vunpack.c.l.b16 %v1330
        %v1399 = vunpack.c.l.b16 %v1331
        %v1400 = vunpack.c.l.b16 %v1332
        %v1401 = vunpack.c.l.b16 %v1333
        %v1402 = vunpack.c.l.b16 %v1334
        %v1403 = vunpack.c.l.b16 %v1335
        %v1404 = vunpack.c.l.b16 %v1336
        %v1405 = vunpack.c.l.b16 %v1337
        %v1406 = vunpack.c.l.b16 %v1338
        %v1407 = vunpack.c.l.b16 %v1339
        %v1408 = vunpack.c.l.b16 %v1340
        %v1409 = vunpack.c.l.b16 %v1341
        %v1410 = vunpack.c.l.b16 %v1342
        %v1411 = vunpack.c.l.b16 %v1343
        %v1412 = vunpack.c.l.b16 %v1344
        %v1413 = vunpack.c.l.b16 %v1345
        %v1414 = vunpack.c.l.b16 %v1346
        %v1415 = vunpack.c.l.b16 %v1347
        %v1416 = vunpack.c.l.b16 %v1348
        %v1417 = vunpack.c.l.b16 %v1349
        %v1418 = vunpack.c.l.b16 %v1350
        %v1419 = vunpack.c.l.b16 %v1351
        %v1420 = vpack.c.b16 %v1389, %v1388
        %v1421 = vpack.c.b16 %v1391, %v1390
        %v1422 = vpack.c.b16 %v1393, %v1392
        %v1423 = vpack.c.b16 %v1395, %v1394
        %v1424 = vpack.c.b16 %v1397, %v1396
        %v1425 = vpack.c.b16 %v1399, %v1398
        %v1426 = vpack.c.b16 %v1401, %v1400
        %v1427 = vpack.c.b16 %v1403, %v1402
        %v1428 = vpack.c.b16 %v1405, %v1404
        %v1429 = vpack.c.b16 %v1407, %v1406
        %v1430 = vpack.c.b16 %v1409, %v1408
        %v1431 = vpack.c.b16 %v1411, %v1410
        %v1432 = vpack.c.b16 %v1413, %v1412
        %v1433 = vpack.c.b16 %v1415, %v1414
        %v1434 = vpack.c.b16 %v1417, %v1416
        %v1435 = vpack.c.b16 %v1419, %v1418
        %v1440 = vunpack.c.l.b16 %v1352
        %v1441 = vunpack.c.h.b16 %v1352
        %v1442 = vunpack.c.l.b16 %v1353
        %v1443 = vunpack.c.h.b16 %v1353
        %v1444 = vunpack.c.l.b16 %v1354
        %v1445 = vunpack.c.h.b16 %v1354
        %v1446 = vunpack.c.l.b16 %v1355
        %v1447 = vunpack.c.h.b16 %v1355
        %v1448 = vpack.c.b16 %v1442, %v1440
        %v1449 = vpack.c.b16 %v1443, %v1441
        %v1450 = vpack.c.b16 %v1446, %v1444
        %v1451 = vpack.c.b16 %v1447, %v1445
        %vm1456 = vcmask 261120
        %v1458 = vsel %vm1456, %v1420, 0
        %v1461 = vsel %vm1456, %v1421, 0
        %v1464 = vsel %vm1456, %v1422, 0
        %v1467 = vsel %vm1456, %v1423, 0
        %v1470 = vsel %vm1456, %v1424, 0
        %v1473 = vsel %vm1456, %v1425, 0
        %v1476 = vsel %vm1456, %v1426, 0
        %v1479 = vsel %vm1456, %v1427, 0
        %v1482 = vsel %vm1456, %v1428, 0
        %v1485 = vsel %vm1456, %v1429, 0
        %v1488 = vsel %vm1456, %v1430, 0
        %v1491 = vsel %vm1456, %v1431, 0
        %v1494 = vsel %vm1456, %v1432, 0
        %v1497 = vsel %vm1456, %v1433, 0
        %v1500 = vsel %vm1456, %v1434, 0
        %v1503 = vsel %vm1456, %v1435, 0
        %1505 = vmatprep.subr.bf16.mxu0 0
        %1506 = vmatpush1.bf16.msra.mxu0 0
        %1507 = vmatprep.subr.bf16.mxu0 0
        %1508 = vmatpush1.bf16.msra.mxu0 0
        %1509 = vmatprep.subr.bf16.mxu0 0
        %1510 = vmatpush1.bf16.msra.mxu0 0
        %1511 = vmatprep.subr.bf16.mxu0 0
        %1512 = vmatpush1.bf16.msra.mxu0 0
        %1513 = vmatprep.subr.bf16.mxu0 0
        %1514 = vmatpush1.bf16.msra.mxu0 0
        %1515 = vmatprep.subr.bf16.mxu0 0
        %1516 = vmatpush1.bf16.msra.mxu0 0
        %1517 = vmatprep.subr.bf16.mxu0 %v1451
        %1518 = vmatpush1.bf16.msra.mxu0 %v1450
        %1519 = vmatprep.subr.bf16.mxu0 %v1449
        %1520 = vmatpush1.bf16.msra.mxu0 %v1448
        %1521 = vmatprep.subr.bf16.mxu0 0
        %1522 = vmatpush2.bf16.msra.mxu0 0
        %1523 = vmatprep.subr.bf16.mxu0 0
        %1524 = vmatpush2.bf16.msra.mxu0 0
        %1525 = vmatprep.subr.bf16.mxu0 0
        %1526 = vmatpush2.bf16.msra.mxu0 0
        %1527 = vmatprep.subr.bf16.mxu0 0
        %1528 = vmatpush2.bf16.msra.mxu0 0
        %1529 = vmatprep.subr.bf16.mxu0 0
        %1530 = vmatpush2.bf16.msra.mxu0 0
        %1531 = vmatprep.subr.bf16.mxu0 0
        %1532 = vmatpush2.bf16.msra.mxu0 0
        %1533 = vmatprep.subr.bf16.mxu0 0
        %1534 = vmatpush2.bf16.msra.mxu0 0
        %1535 = vmatprep.subr.bf16.mxu0 0
        %1536 = vmatpush2.bf16.msra.mxu0 0
        %1537 = vmatprep.mubr.bf16.mxu0 0
        %1538 = vmatmul.mubr.bf16.gmra.mxu0 %v1458
        %v1539 = vpop.f32.mrf.mxu0
        %v1540 = vadd.f32 0.0, %v1539
        %v1541 = vpop.f32.mrf.mxu0
        %v1542 = vadd.f32 0.0, %v1541
        %v1543 = vpop.f32.mrf.mxu0
        %v1544 = vadd.f32 0.0, %v1543
        %v1545 = vpop.f32.mrf.mxu0
        %v1546 = vadd.f32 0.0, %v1545
        %1547 = vmatprep.mubr.bf16.mxu0 0
        %1548 = vmatmul.mubr.bf16.gmra.mxu0 %v1461
        %v1549 = vpop.f32.mrf.mxu0
        %v1550 = vadd.f32 0.0, %v1549
        %v1551 = vpop.f32.mrf.mxu0
        %v1552 = vadd.f32 0.0, %v1551
        %v1553 = vpop.f32.mrf.mxu0
        %v1554 = vadd.f32 0.0, %v1553
        %v1555 = vpop.f32.mrf.mxu0
        %v1556 = vadd.f32 0.0, %v1555
        %1557 = vmatprep.mubr.bf16.mxu0 0
        %1558 = vmatmul.mubr.bf16.gmra.mxu0 %v1464
        %v1559 = vpop.f32.mrf.mxu0
        %v1560 = vadd.f32 0.0, %v1559
        %v1561 = vpop.f32.mrf.mxu0
        %v1562 = vadd.f32 0.0, %v1561
        %v1563 = vpop.f32.mrf.mxu0
        %v1564 = vadd.f32 0.0, %v1563
        %v1565 = vpop.f32.mrf.mxu0
        %v1566 = vadd.f32 0.0, %v1565
        %1567 = vmatprep.mubr.bf16.mxu0 0
        %1568 = vmatmul.mubr.bf16.gmra.mxu0 %v1467
        %v1569 = vpop.f32.mrf.mxu0
        %v1570 = vadd.f32 0.0, %v1569
        %v1571 = vpop.f32.mrf.mxu0
        %v1572 = vadd.f32 0.0, %v1571
        %v1573 = vpop.f32.mrf.mxu0
        %v1574 = vadd.f32 0.0, %v1573
        %v1575 = vpop.f32.mrf.mxu0
        %v1576 = vadd.f32 0.0, %v1575
        %1577 = vmatprep.mubr.bf16.mxu0 0
        %1578 = vmatmul.mubr.bf16.gmra.mxu0 %v1470
        %v1579 = vpop.f32.mrf.mxu0
        %v1580 = vadd.f32 0.0, %v1579
        %v1581 = vpop.f32.mrf.mxu0
        %v1582 = vadd.f32 0.0, %v1581
        %v1583 = vpop.f32.mrf.mxu0
        %v1584 = vadd.f32 0.0, %v1583
        %v1585 = vpop.f32.mrf.mxu0
        %v1586 = vadd.f32 0.0, %v1585
        %1587 = vmatprep.mubr.bf16.mxu0 0
        %1588 = vmatmul.mubr.bf16.gmra.mxu0 %v1473
        %v1589 = vpop.f32.mrf.mxu0
        %v1590 = vadd.f32 0.0, %v1589
        %v1591 = vpop.f32.mrf.mxu0
        %v1592 = vadd.f32 0.0, %v1591
        %v1593 = vpop.f32.mrf.mxu0
        %v1594 = vadd.f32 0.0, %v1593
        %v1595 = vpop.f32.mrf.mxu0
        %v1596 = vadd.f32 0.0, %v1595
        %1597 = vmatprep.mubr.bf16.mxu0 0
        %1598 = vmatmul.mubr.bf16.gmra.mxu0 %v1476
        %v1599 = vpop.f32.mrf.mxu0
        %v1600 = vadd.f32 0.0, %v1599
        %v1601 = vpop.f32.mrf.mxu0
        %v1602 = vadd.f32 0.0, %v1601
        %v1603 = vpop.f32.mrf.mxu0
        %v1604 = vadd.f32 0.0, %v1603
        %v1605 = vpop.f32.mrf.mxu0
        %v1606 = vadd.f32 0.0, %v1605
        %1607 = vmatprep.mubr.bf16.mxu0 0
        %1608 = vmatmul.mubr.bf16.gmra.mxu0 %v1479
        %v1609 = vpop.f32.mrf.mxu0
        %v1610 = vadd.f32 0.0, %v1609
        %v1611 = vpop.f32.mrf.mxu0
        %v1612 = vadd.f32 0.0, %v1611
        %v1613 = vpop.f32.mrf.mxu0
        %v1614 = vadd.f32 0.0, %v1613
        %v1615 = vpop.f32.mrf.mxu0
        %v1616 = vadd.f32 0.0, %v1615
        %1617 = vmatprep.mubr.bf16.mxu0 0
        %1618 = vmatmul.mubr.bf16.gmra.mxu0 %v1482
        %v1619 = vpop.f32.mrf.mxu0
        %v1620 = vadd.f32 0.0, %v1619
        %v1621 = vpop.f32.mrf.mxu0
        %v1622 = vadd.f32 0.0, %v1621
        %v1623 = vpop.f32.mrf.mxu0
        %v1624 = vadd.f32 0.0, %v1623
        %v1625 = vpop.f32.mrf.mxu0
        %v1626 = vadd.f32 0.0, %v1625
        %1627 = vmatprep.mubr.bf16.mxu0 0
        %1628 = vmatmul.mubr.bf16.gmra.mxu0 %v1485
        %v1629 = vpop.f32.mrf.mxu0
        %v1630 = vadd.f32 0.0, %v1629
        %v1631 = vpop.f32.mrf.mxu0
        %v1632 = vadd.f32 0.0, %v1631
        %v1633 = vpop.f32.mrf.mxu0
        %v1634 = vadd.f32 0.0, %v1633
        %v1635 = vpop.f32.mrf.mxu0
        %v1636 = vadd.f32 0.0, %v1635
        %1637 = vmatprep.mubr.bf16.mxu0 0
        %1638 = vmatmul.mubr.bf16.gmra.mxu0 %v1488
        %v1639 = vpop.f32.mrf.mxu0
        %v1640 = vadd.f32 0.0, %v1639
        %v1641 = vpop.f32.mrf.mxu0
        %v1642 = vadd.f32 0.0, %v1641
        %v1643 = vpop.f32.mrf.mxu0
        %v1644 = vadd.f32 0.0, %v1643
        %v1645 = vpop.f32.mrf.mxu0
        %v1646 = vadd.f32 0.0, %v1645
        %1647 = vmatprep.mubr.bf16.mxu0 0
        %1648 = vmatmul.mubr.bf16.gmra.mxu0 %v1491
        %v1649 = vpop.f32.mrf.mxu0
        %v1650 = vadd.f32 0.0, %v1649
        %v1651 = vpop.f32.mrf.mxu0
        %v1652 = vadd.f32 0.0, %v1651
        %v1653 = vpop.f32.mrf.mxu0
        %v1654 = vadd.f32 0.0, %v1653
        %v1655 = vpop.f32.mrf.mxu0
        %v1656 = vadd.f32 0.0, %v1655
        %1657 = vmatprep.mubr.bf16.mxu0 0
        %1658 = vmatmul.mubr.bf16.gmra.mxu0 %v1494
        %v1659 = vpop.f32.mrf.mxu0
        %v1660 = vadd.f32 0.0, %v1659
        %v1661 = vpop.f32.mrf.mxu0
        %v1662 = vadd.f32 0.0, %v1661
        %v1663 = vpop.f32.mrf.mxu0
        %v1664 = vadd.f32 0.0, %v1663
        %v1665 = vpop.f32.mrf.mxu0
        %v1666 = vadd.f32 0.0, %v1665
        %1667 = vmatprep.mubr.bf16.mxu0 0
        %1668 = vmatmul.mubr.bf16.gmra.mxu0 %v1497
        %v1669 = vpop.f32.mrf.mxu0
        %v1670 = vadd.f32 0.0, %v1669
        %v1671 = vpop.f32.mrf.mxu0
        %v1672 = vadd.f32 0.0, %v1671
        %v1673 = vpop.f32.mrf.mxu0
        %v1674 = vadd.f32 0.0, %v1673
        %v1675 = vpop.f32.mrf.mxu0
        %v1676 = vadd.f32 0.0, %v1675
        %1677 = vmatprep.mubr.bf16.mxu0 0
        %1678 = vmatmul.mubr.bf16.gmra.mxu0 %v1500
        %v1679 = vpop.f32.mrf.mxu0
        %v1680 = vadd.f32 0.0, %v1679
        %v1681 = vpop.f32.mrf.mxu0
        %v1682 = vadd.f32 0.0, %v1681
        %v1683 = vpop.f32.mrf.mxu0
        %v1684 = vadd.f32 0.0, %v1683
        %v1685 = vpop.f32.mrf.mxu0
        %v1686 = vadd.f32 0.0, %v1685
        %1687 = vmatprep.mubr.bf16.mxu0 0
        %1688 = vmatmul.mubr.bf16.gmra.mxu0 %v1503
        %v1689 = vpop.f32.mrf.mxu0
        %v1690 = vadd.f32 0.0, %v1689
        %v1691 = vpop.f32.mrf.mxu0
        %v1692 = vadd.f32 0.0, %v1691
        %v1693 = vpop.f32.mrf.mxu0
        %v1694 = vadd.f32 0.0, %v1693
        %v1695 = vpop.f32.mrf.mxu0
        %v1696 = vadd.f32 0.0, %v1695
        %1697 = vdwg.mxu0
        %v1698 = vpack.c.bf16 %v1546, %v1542
        %v1699 = vpack.c.bf16 %v1556, %v1552
        %v1700 = vpack.c.bf16 %v1566, %v1562
        %v1701 = vpack.c.bf16 %v1576, %v1572
        %v1702 = vpack.c.bf16 %v1586, %v1582
        %v1703 = vpack.c.bf16 %v1596, %v1592
        %v1704 = vpack.c.bf16 %v1606, %v1602
        %v1705 = vpack.c.bf16 %v1616, %v1612
        %v1706 = vpack.c.bf16 %v1626, %v1622
        %v1707 = vpack.c.bf16 %v1636, %v1632
        %v1708 = vpack.c.bf16 %v1646, %v1642
        %v1709 = vpack.c.bf16 %v1656, %v1652
        %v1710 = vpack.c.bf16 %v1666, %v1662
        %v1711 = vpack.c.bf16 %v1676, %v1672
        %v1712 = vpack.c.bf16 %v1686, %v1682
        %v1713 = vpack.c.bf16 %v1696, %v1692
        %v1714 = vlaneseq
        %v1715 = vshrl.u32 %v1714, 7
        %v1716 = vadd.s32 %v1715, 8
        %v1717 = vadd.s32 %v1715, 16
        %v1718 = vadd.s32 %v1715, 24
        %vm1719 = vcmp.lt.s32.totalorder %v1715, 16
        %vm1720 = vcmp.lt.s32.totalorder %v1716, 16
        %vm1721 = vcmp.lt.s32.totalorder %v1717, 16
        %vm1722 = vcmp.lt.s32.totalorder %v1718, 16
        %v1723 = vsel %vm1719, 1, 0
        %v1724 = vsel %vm1720, 1, 0
        %v1725 = vsel %vm1721, 1, 0
        %v1726 = vsel %vm1722, 1, 0
        %vm1727 = vcmp.eq.s32.totalorder %v1723, 1
        %vm1728 = vcmp.eq.s32.totalorder %v1724, 1
        %vm1729 = vcmp.eq.s32.totalorder %v1725, 1
        %vm1730 = vcmp.eq.s32.totalorder %v1726, 1
        %v1731 = vsel %vm1727, %v1540, -1e+30
        %v1732 = vsel %vm1728, %v1544, -1e+30
        %v1733 = vsel %vm1729, %v1550, -1e+30
        %v1734 = vsel %vm1730, %v1554, -1e+30
        %v1735 = vsel %vm1727, %v1560, -1e+30
        %v1736 = vsel %vm1728, %v1564, -1e+30
        %v1737 = vsel %vm1729, %v1570, -1e+30
        %v1738 = vsel %vm1730, %v1574, -1e+30
        %v1739 = vsel %vm1727, %v1580, -1e+30
        %v1740 = vsel %vm1728, %v1584, -1e+30
        %v1741 = vsel %vm1729, %v1590, -1e+30
        %v1742 = vsel %vm1730, %v1594, -1e+30
        %v1743 = vsel %vm1727, %v1600, -1e+30
        %v1744 = vsel %vm1728, %v1604, -1e+30
        %v1745 = vsel %vm1729, %v1610, -1e+30
        %v1746 = vsel %vm1730, %v1614, -1e+30
        %v1747 = vsel %vm1727, %v1620, -1e+30
        %v1748 = vsel %vm1728, %v1624, -1e+30
        %v1749 = vsel %vm1729, %v1630, -1e+30
        %v1750 = vsel %vm1730, %v1634, -1e+30
        %v1751 = vsel %vm1727, %v1640, -1e+30
        %v1752 = vsel %vm1728, %v1644, -1e+30
        %v1753 = vsel %vm1729, %v1650, -1e+30
        %v1754 = vsel %vm1730, %v1654, -1e+30
        %v1755 = vsel %vm1727, %v1660, -1e+30
        %v1756 = vsel %vm1728, %v1664, -1e+30
        %v1757 = vsel %vm1729, %v1670, -1e+30
        %v1758 = vsel %vm1730, %v1674, -1e+30
        %v1759 = vsel %vm1727, %v1680, -1e+30
        %v1760 = vsel %vm1728, %v1684, -1e+30
        %v1761 = vsel %vm1729, %v1690, -1e+30
        %v1762 = vsel %vm1730, %v1694, -1e+30
        %v1763 = vmax.f32 %v1731, %v1732
        %v1764 = vmax.f32 %v1763, %v1733
        %v1765 = vmax.f32 %v1764, %v1734
        %v1766 = vrot.slane %v1765, 4
        %v1767 = vmax.f32 %v1765, %v1766
        %v1768 = vrot.slane %v1767, 2
        %v1769 = vmax.f32 %v1767, %v1768
        %v1770 = vrot.slane %v1769, 1
        %v1771 = vmax.f32 %v1769, %v1770
        %v1772 = vmax.f32 %v1735, %v1736
        %v1773 = vmax.f32 %v1772, %v1737
        %v1774 = vmax.f32 %v1773, %v1738
        %v1775 = vrot.slane %v1774, 4
        %v1776 = vmax.f32 %v1774, %v1775
        %v1777 = vrot.slane %v1776, 2
        %v1778 = vmax.f32 %v1776, %v1777
        %v1779 = vrot.slane %v1778, 1
        %v1780 = vmax.f32 %v1778, %v1779
        %v1781 = vmax.f32 %v1739, %v1740
        %v1782 = vmax.f32 %v1781, %v1741
        %v1783 = vmax.f32 %v1782, %v1742
        %v1784 = vrot.slane %v1783, 4
        %v1785 = vmax.f32 %v1783, %v1784
        %v1786 = vrot.slane %v1785, 2
        %v1787 = vmax.f32 %v1785, %v1786
        %v1788 = vrot.slane %v1787, 1
        %v1789 = vmax.f32 %v1787, %v1788
        %v1790 = vmax.f32 %v1743, %v1744
        %v1791 = vmax.f32 %v1790, %v1745
        %v1792 = vmax.f32 %v1791, %v1746
        %v1793 = vrot.slane %v1792, 4
        %v1794 = vmax.f32 %v1792, %v1793
        %v1795 = vrot.slane %v1794, 2
        %v1796 = vmax.f32 %v1794, %v1795
        %v1797 = vrot.slane %v1796, 1
        %v1798 = vmax.f32 %v1796, %v1797
        %v1799 = vmax.f32 %v1747, %v1748
        %v1800 = vmax.f32 %v1799, %v1749
        %v1801 = vmax.f32 %v1800, %v1750
        %v1802 = vrot.slane %v1801, 4
        %v1803 = vmax.f32 %v1801, %v1802
        %v1804 = vrot.slane %v1803, 2
        %v1805 = vmax.f32 %v1803, %v1804
        %v1806 = vrot.slane %v1805, 1
        %v1807 = vmax.f32 %v1805, %v1806
        %v1808 = vmax.f32 %v1751, %v1752
        %v1809 = vmax.f32 %v1808, %v1753
        %v1810 = vmax.f32 %v1809, %v1754
        %v1811 = vrot.slane %v1810, 4
        %v1812 = vmax.f32 %v1810, %v1811
        %v1813 = vrot.slane %v1812, 2
        %v1814 = vmax.f32 %v1812, %v1813
        %v1815 = vrot.slane %v1814, 1
        %v1816 = vmax.f32 %v1814, %v1815
        %v1817 = vmax.f32 %v1755, %v1756
        %v1818 = vmax.f32 %v1817, %v1757
        %v1819 = vmax.f32 %v1818, %v1758
        %v1820 = vrot.slane %v1819, 4
        %v1821 = vmax.f32 %v1819, %v1820
        %v1822 = vrot.slane %v1821, 2
        %v1823 = vmax.f32 %v1821, %v1822
        %v1824 = vrot.slane %v1823, 1
        %v1825 = vmax.f32 %v1823, %v1824
        %v1826 = vmax.f32 %v1759, %v1760
        %v1827 = vmax.f32 %v1826, %v1761
        %v1828 = vmax.f32 %v1827, %v1762
        %v1829 = vrot.slane %v1828, 4
        %v1830 = vmax.f32 %v1828, %v1829
        %v1831 = vrot.slane %v1830, 2
        %v1832 = vmax.f32 %v1830, %v1831
        %v1833 = vrot.slane %v1832, 1
        %v1834 = vmax.f32 %v1832, %v1833
        %v1835 = vsub.f32 %v1731, %v1771
        %v1836 = vsub.f32 %v1732, %v1771
        %v1837 = vsub.f32 %v1733, %v1771
        %v1838 = vsub.f32 %v1734, %v1771
        %v1839 = vsub.f32 %v1735, %v1780
        %v1840 = vsub.f32 %v1736, %v1780
        %v1841 = vsub.f32 %v1737, %v1780
        %v1842 = vsub.f32 %v1738, %v1780
        %v1843 = vsub.f32 %v1739, %v1789
        %v1844 = vsub.f32 %v1740, %v1789
        %v1845 = vsub.f32 %v1741, %v1789
        %v1846 = vsub.f32 %v1742, %v1789
        %v1847 = vsub.f32 %v1743, %v1798
        %v1848 = vsub.f32 %v1744, %v1798
        %v1849 = vsub.f32 %v1745, %v1798
        %v1850 = vsub.f32 %v1746, %v1798
        %v1851 = vsub.f32 %v1747, %v1807
        %v1852 = vsub.f32 %v1748, %v1807
        %v1853 = vsub.f32 %v1749, %v1807
        %v1854 = vsub.f32 %v1750, %v1807
        %v1855 = vsub.f32 %v1751, %v1816
        %v1856 = vsub.f32 %v1752, %v1816
        %v1857 = vsub.f32 %v1753, %v1816
        %v1858 = vsub.f32 %v1754, %v1816
        %v1859 = vsub.f32 %v1755, %v1825
        %v1860 = vsub.f32 %v1756, %v1825
        %v1861 = vsub.f32 %v1757, %v1825
        %v1862 = vsub.f32 %v1758, %v1825
        %v1863 = vsub.f32 %v1759, %v1834
        %v1864 = vsub.f32 %v1760, %v1834
        %v1865 = vsub.f32 %v1761, %v1834
        %v1866 = vsub.f32 %v1762, %v1834
        %v1867 = vmul.f32 %v1835, 1.442695
        %v1868 = vpow.pop %v1867
        %v1869 = vmul.f32 %v1836, 1.442695
        %v1870 = vpow.pop %v1869
        %v1871 = vmul.f32 %v1837, 1.442695
        %v1872 = vpow.pop %v1871
        %v1873 = vmul.f32 %v1838, 1.442695
        %v1874 = vpow.pop %v1873
        %v1875 = vmul.f32 %v1839, 1.442695
        %v1876 = vpow.pop %v1875
        %v1877 = vmul.f32 %v1840, 1.442695
        %v1878 = vpow.pop %v1877
        %v1879 = vmul.f32 %v1841, 1.442695
        %v1880 = vpow.pop %v1879
        %v1881 = vmul.f32 %v1842, 1.442695
        %v1882 = vpow.pop %v1881
        %v1883 = vmul.f32 %v1843, 1.442695
        %v1884 = vpow.pop %v1883
        %v1885 = vmul.f32 %v1844, 1.442695
        %v1886 = vpow.pop %v1885
        %v1887 = vmul.f32 %v1845, 1.442695
        %v1888 = vpow.pop %v1887
        %v1889 = vmul.f32 %v1846, 1.442695
        %v1890 = vpow.pop %v1889
        %v1891 = vmul.f32 %v1847, 1.442695
        %v1892 = vpow.pop %v1891
        %v1893 = vmul.f32 %v1848, 1.442695
        %v1894 = vpow.pop %v1893
        %v1895 = vmul.f32 %v1849, 1.442695
        %v1896 = vpow.pop %v1895
        %v1897 = vmul.f32 %v1850, 1.442695
        %v1898 = vpow.pop %v1897
        %v1899 = vmul.f32 %v1851, 1.442695
        %v1900 = vpow.pop %v1899
        %v1901 = vmul.f32 %v1852, 1.442695
        %v1902 = vpow.pop %v1901
        %v1903 = vmul.f32 %v1853, 1.442695
        %v1904 = vpow.pop %v1903
        %v1905 = vmul.f32 %v1854, 1.442695
        %v1906 = vpow.pop %v1905
        %v1907 = vmul.f32 %v1855, 1.442695
        %v1908 = vpow.pop %v1907
        %v1909 = vmul.f32 %v1856, 1.442695
        %v1910 = vpow.pop %v1909
        %v1911 = vmul.f32 %v1857, 1.442695
        %v1912 = vpow.pop %v1911
        %v1913 = vmul.f32 %v1858, 1.442695
        %v1914 = vpow.pop %v1913
        %v1915 = vmul.f32 %v1859, 1.442695
        %v1916 = vpow.pop %v1915
        %v1917 = vmul.f32 %v1860, 1.442695
        %v1918 = vpow.pop %v1917
        %v1919 = vmul.f32 %v1861, 1.442695
        %v1920 = vpow.pop %v1919
        %v1921 = vmul.f32 %v1862, 1.442695
        %v1922 = vpow.pop %v1921
        %v1923 = vmul.f32 %v1863, 1.442695
        %v1924 = vpow.pop %v1923
        %v1925 = vmul.f32 %v1864, 1.442695
        %v1926 = vpow.pop %v1925
        %v1927 = vmul.f32 %v1865, 1.442695
        %v1928 = vpow.pop %v1927
        %v1929 = vmul.f32 %v1866, 1.442695
        %v1930 = vpow.pop %v1929
        %v1931 = vadd.f32 %v1868, %v1870
        %v1932 = vadd.f32 %v1931, %v1872
        %v1933 = vadd.f32 %v1932, %v1874
        %v1934 = vrot.slane %v1933, 4
        %v1935 = vadd.f32 %v1933, %v1934
        %v1936 = vrot.slane %v1935, 2
        %v1937 = vadd.f32 %v1935, %v1936
        %v1938 = vrot.slane %v1937, 1
        %v1939 = vadd.f32 %v1937, %v1938
        %v1940 = vadd.f32 %v1876, %v1878
        %v1941 = vadd.f32 %v1940, %v1880
        %v1942 = vadd.f32 %v1941, %v1882
        %v1943 = vrot.slane %v1942, 4
        %v1944 = vadd.f32 %v1942, %v1943
        %v1945 = vrot.slane %v1944, 2
        %v1946 = vadd.f32 %v1944, %v1945
        %v1947 = vrot.slane %v1946, 1
        %v1948 = vadd.f32 %v1946, %v1947
        %v1949 = vadd.f32 %v1884, %v1886
        %v1950 = vadd.f32 %v1949, %v1888
        %v1951 = vadd.f32 %v1950, %v1890
        %v1952 = vrot.slane %v1951, 4
        %v1953 = vadd.f32 %v1951, %v1952
        %v1954 = vrot.slane %v1953, 2
        %v1955 = vadd.f32 %v1953, %v1954
        %v1956 = vrot.slane %v1955, 1
        %v1957 = vadd.f32 %v1955, %v1956
        %v1958 = vadd.f32 %v1892, %v1894
        %v1959 = vadd.f32 %v1958, %v1896
        %v1960 = vadd.f32 %v1959, %v1898
        %v1961 = vrot.slane %v1960, 4
        %v1962 = vadd.f32 %v1960, %v1961
        %v1963 = vrot.slane %v1962, 2
        %v1964 = vadd.f32 %v1962, %v1963
        %v1965 = vrot.slane %v1964, 1
        %v1966 = vadd.f32 %v1964, %v1965
        %v1967 = vadd.f32 %v1900, %v1902
        %v1968 = vadd.f32 %v1967, %v1904
        %v1969 = vadd.f32 %v1968, %v1906
        %v1970 = vrot.slane %v1969, 4
        %v1971 = vadd.f32 %v1969, %v1970
        %v1972 = vrot.slane %v1971, 2
        %v1973 = vadd.f32 %v1971, %v1972
        %v1974 = vrot.slane %v1973, 1
        %v1975 = vadd.f32 %v1973, %v1974
        %v1976 = vadd.f32 %v1908, %v1910
        %v1977 = vadd.f32 %v1976, %v1912
        %v1978 = vadd.f32 %v1977, %v1914
        %v1979 = vrot.slane %v1978, 4
        %v1980 = vadd.f32 %v1978, %v1979
        %v1981 = vrot.slane %v1980, 2
        %v1982 = vadd.f32 %v1980, %v1981
        %v1983 = vrot.slane %v1982, 1
        %v1984 = vadd.f32 %v1982, %v1983
        %v1985 = vadd.f32 %v1916, %v1918
        %v1986 = vadd.f32 %v1985, %v1920
        %v1987 = vadd.f32 %v1986, %v1922
        %v1988 = vrot.slane %v1987, 4
        %v1989 = vadd.f32 %v1987, %v1988
        %v1990 = vrot.slane %v1989, 2
        %v1991 = vadd.f32 %v1989, %v1990
        %v1992 = vrot.slane %v1991, 1
        %v1993 = vadd.f32 %v1991, %v1992
        %v1994 = vadd.f32 %v1924, %v1926
        %v1995 = vadd.f32 %v1994, %v1928
        %v1996 = vadd.f32 %v1995, %v1930
        %v1997 = vrot.slane %v1996, 4
        %v1998 = vadd.f32 %v1996, %v1997
        %v1999 = vrot.slane %v1998, 2
        %v2000 = vadd.f32 %v1998, %v1999
        %v2001 = vrot.slane %v2000, 1
        %v2002 = vadd.f32 %v2000, %v2001
        %v2003 = vunpack.c.l.bf16 %v1698
        %v2004 = vunpack.c.h.bf16 %v1698
        %v2005 = vunpack.c.l.bf16 %v1699
        %v2006 = vunpack.c.h.bf16 %v1699
        %v2007 = vunpack.c.l.bf16 %v1700
        %v2008 = vunpack.c.h.bf16 %v1700
        %v2009 = vunpack.c.l.bf16 %v1701
        %v2010 = vunpack.c.h.bf16 %v1701
        %v2011 = vunpack.c.l.bf16 %v1702
        %v2012 = vunpack.c.h.bf16 %v1702
        %v2013 = vunpack.c.l.bf16 %v1703
        %v2014 = vunpack.c.h.bf16 %v1703
        %v2015 = vunpack.c.l.bf16 %v1704
        %v2016 = vunpack.c.h.bf16 %v1704
        %v2017 = vunpack.c.l.bf16 %v1705
        %v2018 = vunpack.c.h.bf16 %v1705
        %v2019 = vunpack.c.l.bf16 %v1706
        %v2020 = vunpack.c.h.bf16 %v1706
        %v2021 = vunpack.c.l.bf16 %v1707
        %v2022 = vunpack.c.h.bf16 %v1707
        %v2023 = vunpack.c.l.bf16 %v1708
        %v2024 = vunpack.c.h.bf16 %v1708
        %v2025 = vunpack.c.l.bf16 %v1709
        %v2026 = vunpack.c.h.bf16 %v1709
        %v2027 = vunpack.c.l.bf16 %v1710
        %v2028 = vunpack.c.h.bf16 %v1710
        %v2029 = vunpack.c.l.bf16 %v1711
        %v2030 = vunpack.c.h.bf16 %v1711
        %v2031 = vunpack.c.l.bf16 %v1712
        %v2032 = vunpack.c.h.bf16 %v1712
        %v2033 = vunpack.c.l.bf16 %v1713
        %v2034 = vunpack.c.h.bf16 %v1713
        %v2035 = vmul.f32 %v1868, %v2003
        %v2036 = vmul.f32 %v1870, %v2004
        %v2037 = vmul.f32 %v1872, %v2005
        %v2038 = vmul.f32 %v1874, %v2006
        %v2039 = vmul.f32 %v1876, %v2007
        %v2040 = vmul.f32 %v1878, %v2008
        %v2041 = vmul.f32 %v1880, %v2009
        %v2042 = vmul.f32 %v1882, %v2010
        %v2043 = vmul.f32 %v1884, %v2011
        %v2044 = vmul.f32 %v1886, %v2012
        %v2045 = vmul.f32 %v1888, %v2013
        %v2046 = vmul.f32 %v1890, %v2014
        %v2047 = vmul.f32 %v1892, %v2015
        %v2048 = vmul.f32 %v1894, %v2016
        %v2049 = vmul.f32 %v1896, %v2017
        %v2050 = vmul.f32 %v1898, %v2018
        %v2051 = vmul.f32 %v1900, %v2019
        %v2052 = vmul.f32 %v1902, %v2020
        %v2053 = vmul.f32 %v1904, %v2021
        %v2054 = vmul.f32 %v1906, %v2022
        %v2055 = vmul.f32 %v1908, %v2023
        %v2056 = vmul.f32 %v1910, %v2024
        %v2057 = vmul.f32 %v1912, %v2025
        %v2058 = vmul.f32 %v1914, %v2026
        %v2059 = vmul.f32 %v1916, %v2027
        %v2060 = vmul.f32 %v1918, %v2028
        %v2061 = vmul.f32 %v1920, %v2029
        %v2062 = vmul.f32 %v1922, %v2030
        %v2063 = vmul.f32 %v1924, %v2031
        %v2064 = vmul.f32 %v1926, %v2032
        %v2065 = vmul.f32 %v1928, %v2033
        %v2066 = vmul.f32 %v1930, %v2034
        %v2067 = vadd.f32 %v2035, %v2036
        %v2068 = vadd.f32 %v2067, %v2037
        %v2069 = vadd.f32 %v2068, %v2038
        %v2070 = vrot.slane %v2069, 4
        %v2071 = vadd.f32 %v2069, %v2070
        %v2072 = vrot.slane %v2071, 2
        %v2073 = vadd.f32 %v2071, %v2072
        %v2074 = vrot.slane %v2073, 1
        %v2075 = vadd.f32 %v2073, %v2074
        %v2076 = vadd.f32 %v2039, %v2040
        %v2077 = vadd.f32 %v2076, %v2041
        %v2078 = vadd.f32 %v2077, %v2042
        %v2079 = vrot.slane %v2078, 4
        %v2080 = vadd.f32 %v2078, %v2079
        %v2081 = vrot.slane %v2080, 2
        %v2082 = vadd.f32 %v2080, %v2081
        %v2083 = vrot.slane %v2082, 1
        %v2084 = vadd.f32 %v2082, %v2083
        %v2085 = vadd.f32 %v2043, %v2044
        %v2086 = vadd.f32 %v2085, %v2045
        %v2087 = vadd.f32 %v2086, %v2046
        %v2088 = vrot.slane %v2087, 4
        %v2089 = vadd.f32 %v2087, %v2088
        %v2090 = vrot.slane %v2089, 2
        %v2091 = vadd.f32 %v2089, %v2090
        %v2092 = vrot.slane %v2091, 1
        %v2093 = vadd.f32 %v2091, %v2092
        %v2094 = vadd.f32 %v2047, %v2048
        %v2095 = vadd.f32 %v2094, %v2049
        %v2096 = vadd.f32 %v2095, %v2050
        %v2097 = vrot.slane %v2096, 4
        %v2098 = vadd.f32 %v2096, %v2097
        %v2099 = vrot.slane %v2098, 2
        %v2100 = vadd.f32 %v2098, %v2099
        %v2101 = vrot.slane %v2100, 1
        %v2102 = vadd.f32 %v2100, %v2101
        %v2103 = vadd.f32 %v2051, %v2052
        %v2104 = vadd.f32 %v2103, %v2053
        %v2105 = vadd.f32 %v2104, %v2054
        %v2106 = vrot.slane %v2105, 4
        %v2107 = vadd.f32 %v2105, %v2106
        %v2108 = vrot.slane %v2107, 2
        %v2109 = vadd.f32 %v2107, %v2108
        %v2110 = vrot.slane %v2109, 1
        %v2111 = vadd.f32 %v2109, %v2110
        %v2112 = vadd.f32 %v2055, %v2056
        %v2113 = vadd.f32 %v2112, %v2057
        %v2114 = vadd.f32 %v2113, %v2058
        %v2115 = vrot.slane %v2114, 4
        %v2116 = vadd.f32 %v2114, %v2115
        %v2117 = vrot.slane %v2116, 2
        %v2118 = vadd.f32 %v2116, %v2117
        %v2119 = vrot.slane %v2118, 1
        %v2120 = vadd.f32 %v2118, %v2119
        %v2121 = vadd.f32 %v2059, %v2060
        %v2122 = vadd.f32 %v2121, %v2061
        %v2123 = vadd.f32 %v2122, %v2062
        %v2124 = vrot.slane %v2123, 4
        %v2125 = vadd.f32 %v2123, %v2124
        %v2126 = vrot.slane %v2125, 2
        %v2127 = vadd.f32 %v2125, %v2126
        %v2128 = vrot.slane %v2127, 1
        %v2129 = vadd.f32 %v2127, %v2128
        %v2130 = vadd.f32 %v2063, %v2064
        %v2131 = vadd.f32 %v2130, %v2065
        %v2132 = vadd.f32 %v2131, %v2066
        %v2133 = vrot.slane %v2132, 4
        %v2134 = vadd.f32 %v2132, %v2133
        %v2135 = vrot.slane %v2134, 2
        %v2136 = vadd.f32 %v2134, %v2135
        %v2137 = vrot.slane %v2136, 1
        %v2138 = vadd.f32 %v2136, %v2137
        %v2139 = vrcp.pop %v1939
        %v2140 = vrcp.pop %v1948
        %v2141 = vrcp.pop %v1957
        %v2142 = vrcp.pop %v1966
        %v2143 = vrcp.pop %v1975
        %v2144 = vrcp.pop %v1984
        %v2145 = vrcp.pop %v1993
        %v2146 = vrcp.pop %v2002
        %v2147 = vmul.f32 %v2075, %v2139
        %v2148 = vmul.f32 %v2084, %v2140
        %v2149 = vmul.f32 %v2093, %v2141
        %v2150 = vmul.f32 %v2102, %v2142
        %v2151 = vmul.f32 %v2111, %v2143
        %v2152 = vmul.f32 %v2120, %v2144
        %v2153 = vmul.f32 %v2129, %v2145
        %v2154 = vmul.f32 %v2138, %v2146
        %v2155 = vld [vmem:[%s324] sm:$0x1]
        %v2157 = vlaneseq
        %v2158 = vshrl.u32 %v2157, 7
        %v2159 = vsub.s32 0, %v2158
        %v2160 = vrot.slane %v2155, %v2159
        %v2162 = vadd.f32 %v2147, %v2160
        %v2163 = vadd.f32 %v2148, %v2160
        %v2164 = vadd.f32 %v2149, %v2160
        %v2165 = vadd.f32 %v2150, %v2160
        %v2166 = vadd.f32 %v2151, %v2160
        %v2167 = vadd.f32 %v2152, %v2160
        %v2168 = vadd.f32 %v2153, %v2160
        %v2169 = vadd.f32 %v2154, %v2160
        %v2178 = vrot.slane %v2163, 7
        %vm2179 = vcmask 1041409
        %v2180 = vsel %vm2179, %v2178, %v2162
        %v2181 = vrot.slane %v2164, 6
        %vm2182 = vcmask 1042434
        %v2183 = vsel %vm2182, %v2181, %v2180
        %v2184 = vrot.slane %v2165, 5
        %vm2185 = vcmask 1043459
        %v2186 = vsel %vm2185, %v2184, %v2183
        %v2187 = vrot.slane %v2166, 4
        %vm2188 = vcmask 1044484
        %v2189 = vsel %vm2188, %v2187, %v2186
        %v2190 = vrot.slane %v2167, 3
        %vm2191 = vcmask 1045509
        %v2192 = vsel %vm2191, %v2190, %v2189
        %v2193 = vrot.slane %v2168, 2
        %vm2194 = vcmask 1046534
        %v2195 = vsel %vm2194, %v2193, %v2192
        %v2196 = vrot.slane %v2169, 1
        %vm2197 = vcmask 1047559
        %v2198 = vsel %vm2197, %v2196, %v2195
        %2200 = vst [vmem:[%s320] sm:$0xff] %v2198
        %s2201 = sand.u32 %s165, 1
        %s2202 = scalar_lea.sflag [#allocation5], %s2201
        %s2203 = sand.u32 %s165, 1
        %s2204 = smul.addr %s2203, 8
        %s2205 = scalar_lea.vmem [#allocation9], %s2204
        // Predicated region
        $region57: #{tpu_custom_call.1} parent=39 // pred_check
          %p2206 = pneg %p175
        $region58: #{tpu_custom_call.1} parent=39 // pred_check_branch
          %2208 = sbr.rel (%p2206) target = $region60
        $region59: #{tpu_custom_call.1} parent=39 // pred_region
          %s2210 = ssub.s32 128, 128
          %2211 = vsyncadd %s2202, %s2210
          %s2212 = smul.addr %s27, 2
          %s2213 = sadd.s32 %s28, %s2212
          %s2214 = smul.addr %s2213, 128
          %s2215 = scalar_lea.hbm %s5, %s2214
          %s2217 = sshll.u32 %s2205, 4
          %s2218 = int_to_ptr.vmem [resolvable:$true] %s2217
          %2220 = dma.vmem_to_hbm [thread:$0]  %s2218, 128, %s2215, %s2202
        $region60: #{tpu_custom_call.1} parent=39 // pred_fallthru
          _
      $region40: #{tpu_custom_call.1} parent=5 // pred_fallthru
        _
      %p2221 = scmp.le.s32.totalorder 2, %s18
      // Predicated region
      $region61: #{tpu_custom_call.1} parent=5 // pred_check
        %p2222 = pneg %p2221
      $region62: #{tpu_custom_call.1} parent=5 // pred_check_branch
        %2224 = sbr.rel (%p2222) target = $region64
      $region63: #{tpu_custom_call.1} parent=5 // pred_region
        %s2225 = ssub.s32 %s18, 2
        // Predicated region
        $region65: #{tpu_custom_call.1} parent=63 // pred_check
          %p2226 = pneg %p181
        $region66: #{tpu_custom_call.1} parent=63 // pred_check_branch
          %2228 = sbr.rel (%p2226) target = $region68
        $region67: #{tpu_custom_call.1} parent=63 // pred_region
          %s2229 = sand.u32 %s166, 1
          %s2230 = scalar_lea.sflag [#allocation5], %s2229
          %s2231 = sand.u32 %s166, 1
          %s2232 = smul.addr %s2231, 8
          %s2233 = scalar_lea.vmem [#allocation9], %s2232
          %2234 = dma.done %s2230, 128
        $region68: #{tpu_custom_call.1} parent=63 // pred_fallthru
          _
      $region64: #{tpu_custom_call.1} parent=5 // pred_fallthru
        _
    $region6: #{tpu_custom_call.1} parent=1 // loop_footer
      %s22 = sadd.s32 1, %s18
    $region7: #{tpu_custom_call.1} parent=1 // loop_footer_branch
      %17 = sbr.rel target = $region3
    $region8: #{tpu_custom_call.1} parent=1 // loop_exit
      _
    %2235 = vsyncpa [#allocation4], 1
    %s2236 = scalar_lea.sflag [#allocation4], 1
    %2237 = vsyncpa %s2236, 1
    %2238 = vsyncpa [#allocation7], 1
    %2239 = vsyncpa [#allocation5], 1
    %s2240 = scalar_lea.sflag [#allocation5], 1
    %2241 = vsyncpa %s2240, 1

</llo_original>
